<compile_context>
chip_gen: v7x
topology: tpu7x:2x2x1
jax: 0.10.0
libtpu: 0.0.40
codegen_flags: <defaults>
</compile_context>

<pallas_src>
import functools
import numpy as np
import jax
import jax.numpy as jnp
from jax import lax
from jax.experimental import pallas as pl
from jax.experimental.pallas import tpu as pltpu


# ---------------------------------------------------------------------------
# host-side planning helpers
# ---------------------------------------------------------------------------
def _plan(n_atoms, rotatable_bonds, branch_atoms, base_np):
    """Reorder atoms so every branch is a contiguous range (laminar branch sets),
    and precompute per-bond static information (ranges, aligned slabs, and
    compile-time Rodrigues coefficients for bonds with lane-invariant axes)."""
    sets = [frozenset(b) for b in branch_atoms]
    by_size = sorted(range(len(sets)), key=lambda b: -len(sets[b]))

    def key(a):
        return tuple(1 if a in sets[b] else 0 for b in by_size)

    perm = sorted(range(n_atoms), key=key)            # new position -> original atom
    pos = {a: i for i, a in enumerate(perm)}          # original atom -> new position
    new_pos = np.array([pos[a] for a in range(n_atoms)], dtype=np.int32)

    bond_info = []
    earlier = set()
    branch_lo = n_atoms
    for (a1, a2), br in zip(rotatable_bonds, branch_atoms):
        if len(br) == 0:
            bond_info.append(dict(s0=0, s1=0, s0a=0, s1a=0, static_axis=True,
                                  origin=(0.0, 0.0, 0.0), coeffs=None, a1p=0, a2p=0))
            continue
        ps = sorted(pos[a] for a in br)
        assert ps == list(range(ps[0], ps[0] + len(ps))), \
            "branch atom sets must be laminar (nested or disjoint)"
        s0, s1 = ps[0], ps[0] + len(ps)
        branch_lo = min(branch_lo, s0)
        s0a, s1a = 8 * (s0 // 8), 8 * ((s1 + 7) // 8)
        static = (a1 not in earlier) and (a2 not in earlier)
        info = dict(s0=s0, s1=s1, s0a=s0a, s1a=s1a, static_axis=static,
                    a1p=pos[a1], a2p=pos[a2], origin=None, coeffs=None)
        if static:
            # Bond axis / origin equal the base-conformer values (anchors untouched
            # by all earlier torsions) -> fold into compile-time scalar coefficients:
            #   R_ij = alpha_ij * cos(theta) + beta_ij * sin(theta) + gamma_ij
            k = np.asarray(base_np[a2], np.float64) - np.asarray(base_np[a1], np.float64)
            k = k / np.linalg.norm(k)
            kx, ky, kz = float(k[0]), float(k[1]), float(k[2])
            info["origin"] = (float(base_np[a1][0]), float(base_np[a1][1]),
                              float(base_np[a1][2]))
            info["coeffs"] = (
                (1.0 - kx * kx, 0.0, kx * kx),   # R00
                (-kx * ky, -kz, kx * ky),        # R01
                (-kx * kz, ky, kx * kz),         # R02
                (-kx * ky, kz, kx * ky),         # R10
                (1.0 - ky * ky, 0.0, ky * ky),   # R11
                (-ky * kz, -kx, ky * kz),        # R12
                (-kx * kz, -ky, kx * kz),        # R20
                (-ky * kz, kx, ky * kz),         # R21
                (1.0 - kz * kz, 0.0, kz * kz),   # R22
            )
        bond_info.append(info)
        earlier |= set(br)

    return np.array(perm, np.int32), new_pos, tuple(bond_info), branch_lo


def _chip_info():
    """(num_tensorcores_behind_one_device, physical VMEM bytes) with safe fallbacks."""
    vmem_cap = 128 << 20
    num_cores = 1
    kind = ""
    try:
        kind = jax.devices()[0].device_kind.lower()
    except Exception:
        pass
    if "v7" in kind:
        vmem_cap = 64 << 20
        num_cores = 2
    if ("v4" in kind) or ("v5p" in kind):
        num_cores = 2
    try:
        info = pltpu.get_tpu_info()
        vmem_cap = int(getattr(info, "vmem_capacity_bytes", vmem_cap))
    except Exception:
        pass
    return num_cores, vmem_cap


def _choose_tiling(n_conf, a_pad, n_params, num_cores, vmem_cap, inner=128):
    """Pick (padded n_conf, conformer tile, grid length). Single-TC chips take the
    largest tile (fewest grid steps); 2-TC chips get an even grid >= 2."""
    lane = 128
    n128 = lane * pl.cdiv(n_conf, lane)
    budget = max(8 << 20, min(vmem_cap // 2, 48 << 20))
    p8 = 8 * pl.cdiv(n_params, 8)
    fixed = 4 * (2 * a_pad * 128 + 3 * a_pad * inner)           # base block + scratch
    per_lane = 4 * (2 * p8 + 2 * 3 * a_pad)                     # params + out, 2x buffered
    max_tile = max(lane, ((budget - fixed) // per_lane // lane) * lane)
    max_tile = min(max_tile, 4096)

    g = pl.cdiv(n128, max_tile)
    if num_cores >= 2:
        g = num_cores * pl.cdiv(g, num_cores)                   # even grid, >= 2
    g = max(g, 1)
    tile = lane * pl.cdiv(pl.cdiv(n128, g), lane)
    n_pad = tile * g
    return n_pad, tile, inner, g


def _vmem_limit_bytes(n_params, a_pad, tile, inner, vmem_cap):
    p8 = 8 * pl.cdiv(n_params, 8)
    need = 4 * (2 * p8 * tile + 2 * 3 * a_pad * tile + 2 * a_pad * 128 + 3 * a_pad * inner)
    need += 4 << 20                      # compiler temporaries headroom
    limit = max(need, 32 << 20)
    return int(min(limit, vmem_cap - (4 << 20)))


# ---------------------------------------------------------------------------
# kernel
# ---------------------------------------------------------------------------
def _drug_conf_kernel(bond_info, n_rot, inner, n_chunks, b_lo8,
                      params_ref, base_ref, out_ref,
                      xs_ref, ys_ref, zs_ref):
    a_pad = base_ref.shape[0]            # padded atom count (multiple of 8)

    # Rows [0, b_lo8) are never modified by any torsion: initialize them once per
    # grid step (cheap, and safe under megacore grid sharding).
    if b_lo8 > 0:
        xs_ref[0:b_lo8, :] = jnp.broadcast_to(base_ref[0:b_lo8, 0:1], (b_lo8, inner))
        ys_ref[0:b_lo8, :] = jnp.broadcast_to(base_ref[0:b_lo8, 1:2], (b_lo8, inner))
        zs_ref[0:b_lo8, :] = jnp.broadcast_to(base_ref[0:b_lo8, 2:3], (b_lo8, inner))

    def chunk(lo):
        # ---- re-init only the (contiguous) branch tail for this lane chunk
        tail = a_pad - b_lo8
        if tail > 0:
            xs_ref[b_lo8:a_pad, :] = jnp.broadcast_to(base_ref[b_lo8:a_pad, 0:1], (tail, inner))
            ys_ref[b_lo8:a_pad, :] = jnp.broadcast_to(base_ref[b_lo8:a_pad, 1:2], (tail, inner))
            zs_ref[b_lo8:a_pad, :] = jnp.broadcast_to(base_ref[b_lo8:a_pad, 2:3], (tail, inner))

        # ---- batched trig: rows 0..2 = half Euler angles, 3..2+n_rot = torsions
        ang = params_ref[3:6 + n_rot, pl.ds(lo, inner)]
        rows = lax.broadcasted_iota(jnp.int32, (3 + n_rot, inner), 0)
        ang = jnp.where(rows < 3, ang * 0.5, ang)
        coss = jnp.cos(ang)
        sins = jnp.sin(ang)

        # ---- torsion rotations on 8-aligned branch slabs (mask-blended)
        for b, info in enumerate(bond_info):
            s0, s1, s0a, s1a = info["s0"], info["s1"], info["s0a"], info["s1a"]
            if s1 <= s0:
                continue
            cth = coss[3 + b:4 + b, :]
            sth = sins[3 + b:4 + b, :]

            if info["static_axis"]:
                ox, oy, oz = info["origin"]                  # python float constants

                def mk(al, be, ga, _c=cth, _s=sth):
                    r = ga + al * _c
                    if be != 0.0:
                        r = r + be * _s
                    return r

                (R00, R01, R02, R10, R11, R12, R20, R21, R22) = [
                    mk(*c) for c in info["coeffs"]]
            else:
                a1p, a2p = info["a1p"], info["a2p"]
                ox = xs_ref[a1p:a1p + 1, :]
                oy = ys_ref[a1p:a1p + 1, :]
                oz = zs_ref[a1p:a1p + 1, :]
                kx = xs_ref[a2p:a2p + 1, :] - ox
                ky = ys_ref[a2p:a2p + 1, :] - oy
                kz = zs_ref[a2p:a2p + 1, :] - oz
                d = kx * kx + ky * ky + kz * kz
                inv = lax.rsqrt(d)
                inv = inv * (1.5 - 0.5 * d * inv * inv)      # one Newton step
                kx, ky, kz = kx * inv, ky * inv, kz * inv
                oc = 1.0 - cth
                kxoc, kyoc, kzoc = kx * oc, ky * oc, kz * oc
                kxs, kys, kzs = kx * sth, ky * sth, kz * sth
                R00 = cth + kx * kxoc
                R01 = kx * kyoc - kzs
                R02 = kx * kzoc + kys
                R10 = ky * kxoc + kzs
                R11 = cth + ky * kyoc
                R12 = ky * kzoc - kxs
                R20 = kz * kxoc - kys
                R21 = kz * kyoc + kxs
                R22 = cth + kz * kzoc

            old_x = xs_ref[s0a:s1a, :]
            old_y = ys_ref[s0a:s1a, :]
            old_z = zs_ref[s0a:s1a, :]
            rx = old_x - ox
            ry = old_y - oy
            rz = old_z - oz
            nx = R00 * rx + R01 * ry + R02 * rz + ox
            ny = R10 * rx + R11 * ry + R12 * rz + oy
            nz = R20 * rx + R21 * ry + R22 * rz + oz
            if s0a != s0 or s1a != s1:
                r_iota = lax.broadcasted_iota(jnp.int32, (s1a - s0a, inner), 0) + s0a
                m = jnp.logical_and(r_iota >= s0, r_iota < s1)
                nx = jnp.where(m, nx, old_x)
                ny = jnp.where(m, ny, old_y)
                nz = jnp.where(m, nz, old_z)
            xs_ref[s0a:s1a, :] = nx
            ys_ref[s0a:s1a, :] = ny
            zs_ref[s0a:s1a, :] = nz

        # ---- global rigid rotation (Euler -> quaternion) + translation
        cx, cy, cz = coss[0:1, :], coss[1:2, :], coss[2:3, :]
        sx, sy, sz = sins[0:1, :], sins[1:2, :], sins[2:3, :]
        cycz, sysz = cy * cz, sy * sz
        sycz, cysz = sy * cz, cy * sz
        qw = cx * cycz + sx * sysz
        qx = sx * cycz - cx * sysz
        qy = cx * sycz + sx * cysz
        qz = cx * cysz - sx * sycz
        qxx, qyy, qzz = qx * qx, qy * qy, qz * qz
        qxy, qxz, qyz = qx * qy, qx * qz, qy * qz
        qwx, qwy, qwz = qw * qx, qw * qy, qw * qz
        G00 = 1.0 - 2.0 * (qyy + qzz)
        G01 = 2.0 * (qxy - qwz)
        G02 = 2.0 * (qxz + qwy)
        G10 = 2.0 * (qxy + qwz)
        G11 = 1.0 - 2.0 * (qxx + qzz)
        G12 = 2.0 * (qyz - qwx)
        G20 = 2.0 * (qxz - qwy)
        G21 = 2.0 * (qyz + qwx)
        G22 = 1.0 - 2.0 * (qxx + qyy)

        tx = params_ref[0:1, pl.ds(lo, inner)]
        ty = params_ref[1:2, pl.ds(lo, inner)]
        tz = params_ref[2:3, pl.ds(lo, inner)]

        # p' = p @ R_std  (== torch.bmm(points, R.transpose(1,2)) with torch's stack(dim=2))
        # row-blocked (8 sublanes) to bound vreg live ranges; all stores unmasked.
        for r in range(0, a_pad, 8):
            x = xs_ref[r:r + 8, :]
            y = ys_ref[r:r + 8, :]
            z = zs_ref[r:r + 8, :]
            out_ref[0, r:r + 8, pl.ds(lo, inner)] = (
                G00 * x + G10 * y + G20 * z + tx).astype(out_ref.dtype)
            out_ref[1, r:r + 8, pl.ds(lo, inner)] = (
                G01 * x + G11 * y + G21 * z + ty).astype(out_ref.dtype)
            out_ref[2, r:r + 8, pl.ds(lo, inner)] = (
                G02 * x + G12 * y + G22 * z + tz).astype(out_ref.dtype)

    if n_chunks == 1:
        chunk(0)
    else:
        def body(c, carry):
            chunk(pl.multiple_of(c * inner, inner))
            return carry
        lax.fori_loop(0, n_chunks, body, 0)


# ---------------------------------------------------------------------------
# wrapper
# ---------------------------------------------------------------------------
def drug_conformation_forward(conf_params, base_coords, rotatable_bonds,
                              branch_atoms, *, planar_output=False,
                              out_dtype=jnp.float32):
    """Returns coordinates shaped (n_conformers, n_atoms, 3) like the PyTorch module.

    planar_output=True returns the raw (3, A_pad, N_pad) planar slab plus the atom
    permutation (consumers must drop lanes >= n_conf / map rows through perm); this
    skips the extra HBM pass for the transpose+gather entirely.
    """
    conf_params = jnp.asarray(conf_params, jnp.float32)
    base_np = np.asarray(base_coords, dtype=np.float64)
    n_conf, n_params = conf_params.shape
    n_atoms = base_np.shape[0]
    nb = len(rotatable_bonds)
    assert n_params == 6 + nb

    perm, new_pos, bond_info, branch_lo = _plan(
        n_atoms, rotatable_bonds, branch_atoms, base_np)

    a_pad = 8 * pl.cdiv(n_atoms, 8)
    b_lo8 = 8 * (min(branch_lo, n_atoms) // 8)
    base_p = jnp.asarray(base_np[perm], jnp.float32)
    if a_pad > n_atoms:
        base_p = jnp.concatenate(
            [base_p, jnp.zeros((a_pad - n_atoms, 3), jnp.float32)], axis=0)

    num_cores, vmem_cap = _chip_info()
    n_pad, tile, inner, grid = _choose_tiling(n_conf, a_pad, n_params,
                                              num_cores, vmem_cap)
    params_t = jnp.transpose(conf_params)                       # (P, N)
    if n_pad > n_conf:
        params_t = jnp.concatenate(
            [params_t, jnp.zeros((n_params, n_pad - n_conf), jnp.float32)], axis=1)

    n_chunks = tile // inner
    kernel = functools.partial(_drug_conf_kernel, bond_info, nb, inner,
                               n_chunks, b_lo8)

    out = pl.pallas_call(
        kernel,
        out_shape=jax.ShapeDtypeStruct((3, a_pad, n_pad), out_dtype),
        grid_spec=pltpu.PrefetchScalarGridSpec(
            num_scalar_prefetch=0,
            grid=(grid,),
            in_specs=[
                pl.BlockSpec((n_params, tile), lambda i: (0, i)),
                pl.BlockSpec((a_pad, 3), lambda i: (0, 0)),
            ],
            out_specs=pl.BlockSpec((3, a_pad, tile), lambda i: (0, 0, i)),
            scratch_shapes=[pltpu.VMEM((a_pad, inner), jnp.float32)] * 3,
        ),
        compiler_params=pltpu.CompilerParams(
            dimension_semantics=("parallel",),
            vmem_limit_bytes=_vmem_limit_bytes(n_params, a_pad, tile, inner, vmem_cap)),
    )(params_t, base_p)

    if planar_output:
        return out, perm

    # Single fused slice + (optional) gather + transpose back to module layout.
    if np.array_equal(perm, np.arange(n_atoms)):
        res = jnp.transpose(out[:, :n_atoms, :n_conf], (2, 1, 0))
    else:
        res = jnp.transpose(out[:, new_pos, :n_conf], (2, 1, 0))
    return res


# ---------------------------------------------------------------------------
# pure-JAX reference (mirror of the PyTorch forward) for correctness checking
# ---------------------------------------------------------------------------
def reference_forward(conf_params, base_coords, rotatable_bonds, branch_atoms):
    n_conf = conf_params.shape[0]
    base_coords = jnp.asarray(base_coords, jnp.float32)
    coords = jnp.broadcast_to(base_coords[None], (n_conf,) + base_coords.shape)
    for b, ((a1, a2), branch) in enumerate(zip(rotatable_bonds, branch_atoms)):
        if len(branch) == 0:
            continue
        ang = conf_params[:, 6 + b]
        k = coords[:, a2] - coords[:, a1]
        k = k / jnp.linalg.norm(k, axis=1, keepdims=True)
        c = jnp.cos(ang)[:, None, None]
        s = jnp.sin(ang)[:, None, None]
        kx, ky, kz = k[:, 0], k[:, 1], k[:, 2]
        zeros = jnp.zeros_like(kx)
        K = jnp.stack([
            jnp.stack([zeros, -kz, ky], axis=1),
            jnp.stack([kz, zeros, -kx], axis=1),
            jnp.stack([-ky, kx, zeros], axis=1)], axis=1)
        I = jnp.eye(3, dtype=coords.dtype)[None]
        kkt = k[:, :, None] * k[:, None, :]
        R = I * c + K * s + kkt * (1.0 - c)
        branch_i = jnp.array(branch)
        rel = coords[:, branch_i] - coords[:, a1:a1 + 1]
        rot = jnp.einsum('nak,njk->naj', rel, R)
        coords = coords.at[:, branch_i].set(rot + coords[:, a1:a1 + 1])
    ax, ay, az = conf_params[:, 3], conf_params[:, 4], conf_params[:, 5]
    cx_, sx_ = jnp.cos(ax / 2), jnp.sin(ax / 2)
    cy_, sy_ = jnp.cos(ay / 2), jnp.sin(ay / 2)
    cz_, sz_ = jnp.cos(az / 2), jnp.sin(az / 2)
    qw = cx_ * cy_ * cz_ + sx_ * sy_ * sz_
    qx = sx_ * cy_ * cz_ - cx_ * sy_ * sz_
    qy = cx_ * sy_ * cz_ + sx_ * cy_ * sz_
    qz = cx_ * cy_ * sz_ - sx_ * sy_ * cz_
    R00 = 1 - 2 * qy * qy - 2 * qz * qz
    R01 = 2 * qx * qy - 2 * qz * qw
    R02 = 2 * qx * qz + 2 * qy * qw
    R10 = 2 * qx * qy + 2 * qz * qw
    R11 = 1 - 2 * qx * qx - 2 * qz * qz
    R12 = 2 * qy * qz - 2 * qx * qw
    R20 = 2 * qx * qz - 2 * qy * qw
    R21 = 2 * qy * qz + 2 * qx * qw
    R22 = 1 - 2 * qx * qx - 2 * qy * qy
    Rstd = jnp.stack([
        jnp.stack([R00, R01, R02], axis=1),
        jnp.stack([R10, R11, R12], axis=1),
        jnp.stack([R20, R21, R22], axis=1)], axis=1)
    coords = jnp.einsum('nak,nkj->naj', coords, Rstd)
    coords = coords + conf_params[:, None, :3]
    return coords


if __name__ == "__main__":
    key = jax.random.PRNGKey(0)
    n_conformers = 256
    n_atoms = 16
    # includes a chained torsion ((5,6) anchored inside (2,5)'s branch) so both the
    # static-axis and dynamic-axis kernel paths are exercised.
    rotatable_bonds = [(2, 5), (5, 6), (8, 11)]
    branch_atoms = [[5, 6, 7], [6, 7], [11, 12, 13, 14, 15]]
    n_rot = len(rotatable_bonds)

    k1, k2, k3, k4, k5 = jax.random.split(key, 5)
    # synthetic "protein" coordinates just to define the sampling box (volume mode)
    protein_coords = jax.random.normal(k1, (64, 3), jnp.float32) * 8.0
    min_c = protein_coords.min(axis=0)
    max_c = protein_coords.max(axis=0)

    # synthetic ligand base conformer coords (stand-in for mol.GetConformer().GetPositions())
    base_coords = jax.random.normal(k2, (n_atoms, 3), jnp.float32) * 2.0

    # deterministic conf_params init (positions in box, random orientations / torsions)
    positions = min_c + jax.random.uniform(k3, (n_conformers, 3)) * (max_c - min_c)
    orientations = jax.random.uniform(k4, (n_conformers, 3)) * 2.0 * np.pi
    torsions = jax.random.uniform(k5, (n_conformers, n_rot)) * 2.0 * np.pi
    conf_params = jnp.concatenate(
        [positions, orientations, torsions], axis=1).astype(jnp.float32)

    out = drug_conformation_forward(conf_params, base_coords,
                                    rotatable_bonds, branch_atoms)
    out = jax.block_until_ready(out)

    ref = reference_forward(conf_params, base_coords, rotatable_bonds, branch_atoms)
    ref = jax.block_until_ready(ref)
    assert out.shape == (n_conformers, n_atoms, 3)
    np.testing.assert_allclose(np.asarray(out), np.asarray(ref), rtol=1e-4, atol=2e-3)
    print("KERNEL_OK")
</pallas_src>

<mosaic_0001>
module attributes {stable_mosaic.version = 11 : i64} {
  func.func @_drug_conf_kernel(%arg0: i32, %arg1: memref<9x256xf32, #tpu.memory_space<vmem>>, %arg2: memref<16x3xf32, #tpu.memory_space<vmem>>, %arg3: memref<3x16x256xf32, #tpu.memory_space<vmem>>, %arg4: memref<16x128xf32, #tpu.memory_space<vmem>>, %arg5: memref<16x128xf32, #tpu.memory_space<vmem>>, %arg6: memref<16x128xf32, #tpu.memory_space<vmem>>) attributes {dimension_semantics = [#tpu.dimension_semantics<parallel>], iteration_bounds = array<i64: 1>, scalar_prefetch = 0 : i64, scratch_operands = 3 : i64, tpu.core_type = #tpu.core_type<tc>, window_params = [{transform_indices = @transform_0, window_bounds = array<i64: 9, 256>}, {pipeline_mode = #tpu.pipeline_mode<synchronous>, transform_indices = @transform_1, window_bounds = array<i64: 16, 3>}, {transform_indices = @transform_2, window_bounds = array<i64: 3, 16, 256>}]} {
    %c0 = arith.constant 0 : index
    %c0_0 = arith.constant 0 : index
    %0 = vector.load %arg2[%c0, %c0_0] : memref<16x3xf32, #tpu.memory_space<vmem>>, vector<8x1xf32>
    %1 = vector.shape_cast %0 : vector<8x1xf32> to vector<8x1xf32>
    %2 = vector.broadcast %1 : vector<8x1xf32> to vector<8x128xf32>
    %c0_1 = arith.constant 0 : index
    %c0_2 = arith.constant 0 : index
    %3 = vector.load %arg4[%c0_1, %c0_2] : memref<16x128xf32, #tpu.memory_space<vmem>>, vector<8x128xf32>
    tpu.vector_store %arg4[%c0_1, %c0_2], %2 {strides = array<i32>} : memref<16x128xf32, #tpu.memory_space<vmem>>, vector<8x128xf32>,
    %c0_3 = arith.constant 0 : index
    %c1 = arith.constant 1 : index
    %4 = vector.load %arg2[%c0_3, %c1] : memref<16x3xf32, #tpu.memory_space<vmem>>, vector<8x1xf32>
    %5 = vector.shape_cast %4 : vector<8x1xf32> to vector<8x1xf32>
    %6 = vector.broadcast %5 : vector<8x1xf32> to vector<8x128xf32>
    %c0_4 = arith.constant 0 : index
    %c0_5 = arith.constant 0 : index
    %7 = vector.load %arg5[%c0_4, %c0_5] : memref<16x128xf32, #tpu.memory_space<vmem>>, vector<8x128xf32>
    tpu.vector_store %arg5[%c0_4, %c0_5], %6 {strides = array<i32>} : memref<16x128xf32, #tpu.memory_space<vmem>>, vector<8x128xf32>,
    %c0_6 = arith.constant 0 : index
    %c2 = arith.constant 2 : index
    %8 = vector.load %arg2[%c0_6, %c2] : memref<16x3xf32, #tpu.memory_space<vmem>>, vector<8x1xf32>
    %9 = vector.shape_cast %8 : vector<8x1xf32> to vector<8x1xf32>
    %10 = vector.broadcast %9 : vector<8x1xf32> to vector<8x128xf32>
    %c0_7 = arith.constant 0 : index
    %c0_8 = arith.constant 0 : index
    %11 = vector.load %arg6[%c0_7, %c0_8] : memref<16x128xf32, #tpu.memory_space<vmem>>, vector<8x128xf32>
    tpu.vector_store %arg6[%c0_7, %c0_8], %10 {strides = array<i32>} : memref<16x128xf32, #tpu.memory_space<vmem>>, vector<8x128xf32>,
    %c0_i32 = arith.constant 0 : i32
    %c2_i32 = arith.constant 2 : i32
    %12 = arith.addi %c0_i32, %c2_i32 : i32
    %c1_i32 = arith.constant 1 : i32
    scf.for %arg7 = %c0_i32 to %12 step %c1_i32  : i32 {
      %c128_i32 = arith.constant 128 : i32
      %13 = arith.muli %arg7, %c128_i32 : i32
      %14 = tpu.assume_multiple %13, 128 : i32
      %c8 = arith.constant 8 : index
      %c0_10 = arith.constant 0 : index
      %15 = vector.load %arg2[%c8, %c0_10] : memref<16x3xf32, #tpu.memory_space<vmem>>, vector<8x1xf32>
      %16 = vector.shape_cast %15 : vector<8x1xf32> to vector<8x1xf32>
      %17 = vector.broadcast %16 : vector<8x1xf32> to vector<8x128xf32>
      %c8_11 = arith.constant 8 : index
      %c0_12 = arith.constant 0 : index
      %18 = vector.load %arg4[%c8_11, %c0_12] : memref<16x128xf32, #tpu.memory_space<vmem>>, vector<8x128xf32>
      tpu.vector_store %arg4[%c8_11, %c0_12], %17 {strides = array<i32>} : memref<16x128xf32, #tpu.memory_space<vmem>>, vector<8x128xf32>,
      %c8_13 = arith.constant 8 : index
      %c1_14 = arith.constant 1 : index
      %19 = vector.load %arg2[%c8_13, %c1_14] : memref<16x3xf32, #tpu.memory_space<vmem>>, vector<8x1xf32>
      %20 = vector.shape_cast %19 : vector<8x1xf32> to vector<8x1xf32>
      %21 = vector.broadcast %20 : vector<8x1xf32> to vector<8x128xf32>
      %c8_15 = arith.constant 8 : index
      %c0_16 = arith.constant 0 : index
      %22 = vector.load %arg5[%c8_15, %c0_16] : memref<16x128xf32, #tpu.memory_space<vmem>>, vector<8x128xf32>
      tpu.vector_store %arg5[%c8_15, %c0_16], %21 {strides = array<i32>} : memref<16x128xf32, #tpu.memory_space<vmem>>, vector<8x128xf32>,
      %c8_17 = arith.constant 8 : index
      %c2_18 = arith.constant 2 : index
      %23 = vector.load %arg2[%c8_17, %c2_18] : memref<16x3xf32, #tpu.memory_space<vmem>>, vector<8x1xf32>
      %24 = vector.shape_cast %23 : vector<8x1xf32> to vector<8x1xf32>
      %25 = vector.broadcast %24 : vector<8x1xf32> to vector<8x128xf32>
      %c8_19 = arith.constant 8 : index
      %c0_20 = arith.constant 0 : index
      %26 = vector.load %arg6[%c8_19, %c0_20] : memref<16x128xf32, #tpu.memory_space<vmem>>, vector<8x128xf32>
      tpu.vector_store %arg6[%c8_19, %c0_20], %25 {strides = array<i32>} : memref<16x128xf32, #tpu.memory_space<vmem>>, vector<8x128xf32>,
      %c3 = arith.constant 3 : index
      %27 = arith.index_cast %14 : i32 to index
      %28 = vector.load %arg1[%c3, %27] : memref<9x256xf32, #tpu.memory_space<vmem>>, vector<6x128xf32>
      %29 = tpu.iota {dimensions = array<i32: 0>} : vector<6x128xi32>
      %c3_i32 = arith.constant 3 : i32
      %30 = vector.broadcast %c3_i32 : i32 to vector<6x128xi32>
      %31 = arith.cmpi slt, %29, %30 : vector<6x128xi32>
      %cst = arith.constant 5.000000e-01 : f32
      %32 = vector.broadcast %cst : f32 to vector<6x128xf32>
      %33 = arith.mulf %28, %32 : vector<6x128xf32>
      %34 = arith.select %31, %33, %28 : vector<6x128xi1>, vector<6x128xf32>
      %35 = math.cos %34 : vector<6x128xf32>
      %36 = math.sin %34 : vector<6x128xf32>
      %37 = vector.extract_strided_slice %35 {offsets = [3, 0], sizes = [1, 128], strides = [1, 1]} : vector<6x128xf32> to vector<1x128xf32>
      %38 = vector.extract_strided_slice %36 {offsets = [3, 0], sizes = [1, 128], strides = [1, 1]} : vector<6x128xf32> to vector<1x128xf32>
      %cst_21 = arith.constant 0.597222388 : f32
      %39 = vector.broadcast %cst_21 : f32 to vector<1x128xf32>
      %40 = arith.mulf %39, %37 : vector<1x128xf32>
      %cst_22 = arith.constant 0.402777612 : f32
      %41 = vector.broadcast %cst_22 : f32 to vector<1x128xf32>
      %42 = arith.addf %41, %40 : vector<1x128xf32>
      %cst_23 = arith.constant 0.376564324 : f32
      %43 = vector.broadcast %cst_23 : f32 to vector<1x128xf32>
      %44 = arith.mulf %43, %37 : vector<1x128xf32>
      %cst_24 = arith.constant -0.376564324 : f32
      %45 = vector.broadcast %cst_24 : f32 to vector<1x128xf32>
      %46 = arith.addf %45, %44 : vector<1x128xf32>
      %cst_25 = arith.constant -0.495141745 : f32
      %47 = vector.broadcast %cst_25 : f32 to vector<1x128xf32>
      %48 = arith.mulf %47, %38 : vector<1x128xf32>
      %49 = arith.addf %46, %48 : vector<1x128xf32>
      %cst_26 = arith.constant -0.314240515 : f32
      %50 = vector.broadcast %cst_26 : f32 to vector<1x128xf32>
      %51 = arith.mulf %50, %37 : vector<1x128xf32>
      %cst_27 = arith.constant 0.314240515 : f32
      %52 = vector.broadcast %cst_27 : f32 to vector<1x128xf32>
      %53 = arith.addf %52, %51 : vector<1x128xf32>
      %cst_28 = arith.constant -5.933440e-01 : f32
      %54 = vector.broadcast %cst_28 : f32 to vector<1x128xf32>
      %55 = arith.mulf %54, %38 : vector<1x128xf32>
      %56 = arith.addf %53, %55 : vector<1x128xf32>
      %cst_29 = arith.constant 0.376564324 : f32
      %57 = vector.broadcast %cst_29 : f32 to vector<1x128xf32>
      %58 = arith.mulf %57, %37 : vector<1x128xf32>
      %cst_30 = arith.constant -0.376564324 : f32
      %59 = vector.broadcast %cst_30 : f32 to vector<1x128xf32>
      %60 = arith.addf %59, %58 : vector<1x128xf32>
      %cst_31 = arith.constant 0.495141745 : f32
      %61 = vector.broadcast %cst_31 : f32 to vector<1x128xf32>
      %62 = arith.mulf %61, %38 : vector<1x128xf32>
      %63 = arith.addf %60, %62 : vector<1x128xf32>
      %cst_32 = arith.constant 0.64794296 : f32
      %64 = vector.broadcast %cst_32 : f32 to vector<1x128xf32>
      %65 = arith.mulf %64, %37 : vector<1x128xf32>
      %cst_33 = arith.constant 0.35205704 : f32
      %66 = vector.broadcast %cst_33 : f32 to vector<1x128xf32>
      %67 = arith.addf %66, %65 : vector<1x128xf32>
      %cst_34 = arith.constant 0.293789357 : f32
      %68 = vector.broadcast %cst_34 : f32 to vector<1x128xf32>
      %69 = arith.mulf %68, %37 : vector<1x128xf32>
      %cst_35 = arith.constant -0.293789357 : f32
      %70 = vector.broadcast %cst_35 : f32 to vector<1x128xf32>
      %71 = arith.addf %70, %69 : vector<1x128xf32>
      %cst_36 = arith.constant -0.634647608 : f32
      %72 = vector.broadcast %cst_36 : f32 to vector<1x128xf32>
      %73 = arith.mulf %72, %38 : vector<1x128xf32>
      %74 = arith.addf %71, %73 : vector<1x128xf32>
      %cst_37 = arith.constant -0.314240515 : f32
      %75 = vector.broadcast %cst_37 : f32 to vector<1x128xf32>
      %76 = arith.mulf %75, %37 : vector<1x128xf32>
      %cst_38 = arith.constant 0.314240515 : f32
      %77 = vector.broadcast %cst_38 : f32 to vector<1x128xf32>
      %78 = arith.addf %77, %76 : vector<1x128xf32>
      %cst_39 = arith.constant 5.933440e-01 : f32
      %79 = vector.broadcast %cst_39 : f32 to vector<1x128xf32>
      %80 = arith.mulf %79, %38 : vector<1x128xf32>
      %81 = arith.addf %78, %80 : vector<1x128xf32>
      %cst_40 = arith.constant 0.293789357 : f32
      %82 = vector.broadcast %cst_40 : f32 to vector<1x128xf32>
      %83 = arith.mulf %82, %37 : vector<1x128xf32>
      %cst_41 = arith.constant -0.293789357 : f32
      %84 = vector.broadcast %cst_41 : f32 to vector<1x128xf32>
      %85 = arith.addf %84, %83 : vector<1x128xf32>
      %cst_42 = arith.constant 0.634647608 : f32
      %86 = vector.broadcast %cst_42 : f32 to vector<1x128xf32>
      %87 = arith.mulf %86, %38 : vector<1x128xf32>
      %88 = arith.addf %85, %87 : vector<1x128xf32>
      %cst_43 = arith.constant 0.754834651 : f32
      %89 = vector.broadcast %cst_43 : f32 to vector<1x128xf32>
      %90 = arith.mulf %89, %37 : vector<1x128xf32>
      %cst_44 = arith.constant 0.245165333 : f32
      %91 = vector.broadcast %cst_44 : f32 to vector<1x128xf32>
      %92 = arith.addf %91, %90 : vector<1x128xf32>
      %c8_45 = arith.constant 8 : index
      %c0_46 = arith.constant 0 : index
      %93 = vector.load %arg4[%c8_45, %c0_46] : memref<16x128xf32, #tpu.memory_space<vmem>>, vector<8x128xf32>
      %c8_47 = arith.constant 8 : index
      %c0_48 = arith.constant 0 : index
      %94 = vector.load %arg5[%c8_47, %c0_48] : memref<16x128xf32, #tpu.memory_space<vmem>>, vector<8x128xf32>
      %c8_49 = arith.constant 8 : index
      %c0_50 = arith.constant 0 : index
      %95 = vector.load %arg6[%c8_49, %c0_50] : memref<16x128xf32, #tpu.memory_space<vmem>>, vector<8x128xf32>
      %cst_51 = arith.constant -2.29643917 : f32
      %96 = vector.broadcast %cst_51 : f32 to vector<8x128xf32>
      %97 = arith.subf %93, %96 : vector<8x128xf32>
      %cst_52 = arith.constant 0.594331563 : f32
      %98 = vector.broadcast %cst_52 : f32 to vector<8x128xf32>
      %99 = arith.subf %94, %98 : vector<8x128xf32>
      %cst_53 = arith.constant -2.62107182 : f32
      %100 = vector.broadcast %cst_53 : f32 to vector<8x128xf32>
      %101 = arith.subf %95, %100 : vector<8x128xf32>
      %102 = vector.broadcast %42 : vector<1x128xf32> to vector<8x128xf32>
      %103 = arith.mulf %102, %97 : vector<8x128xf32>
      %104 = vector.broadcast %49 : vector<1x128xf32> to vector<8x128xf32>
      %105 = arith.mulf %104, %99 : vector<8x128xf32>
      %106 = arith.addf %103, %105 : vector<8x128xf32>
      %107 = vector.broadcast %56 : vector<1x128xf32> to vector<8x128xf32>
      %108 = arith.mulf %107, %101 : vector<8x128xf32>
      %109 = arith.addf %106, %108 : vector<8x128xf32>
      %cst_54 = arith.constant -2.29643917 : f32
      %110 = vector.broadcast %cst_54 : f32 to vector<8x128xf32>
      %111 = arith.addf %109, %110 : vector<8x128xf32>
      %112 = vector.broadcast %63 : vector<1x128xf32> to vector<8x128xf32>
      %113 = arith.mulf %112, %97 : vector<8x128xf32>
      %114 = vector.broadcast %67 : vector<1x128xf32> to vector<8x128xf32>
      %115 = arith.mulf %114, %99 : vector<8x128xf32>
      %116 = arith.addf %113, %115 : vector<8x128xf32>
      %117 = vector.broadcast %74 : vector<1x128xf32> to vector<8x128xf32>
      %118 = arith.mulf %117, %101 : vector<8x128xf32>
      %119 = arith.addf %116, %118 : vector<8x128xf32>
      %cst_55 = arith.constant 0.594331563 : f32
      %120 = vector.broadcast %cst_55 : f32 to vector<8x128xf32>
      %121 = arith.addf %119, %120 : vector<8x128xf32>
      %122 = vector.broadcast %81 : vector<1x128xf32> to vector<8x128xf32>
      %123 = arith.mulf %122, %97 : vector<8x128xf32>
      %124 = vector.broadcast %88 : vector<1x128xf32> to vector<8x128xf32>
      %125 = arith.mulf %124, %99 : vector<8x128xf32>
      %126 = arith.addf %123, %125 : vector<8x128xf32>
      %127 = vector.broadcast %92 : vector<1x128xf32> to vector<8x128xf32>
      %128 = arith.mulf %127, %101 : vector<8x128xf32>
      %129 = arith.addf %126, %128 : vector<8x128xf32>
      %cst_56 = arith.constant -2.62107182 : f32
      %130 = vector.broadcast %cst_56 : f32 to vector<8x128xf32>
      %131 = arith.addf %129, %130 : vector<8x128xf32>
      %132 = tpu.iota {dimensions = array<i32: 0>} : vector<8x128xi32>
      %c8_i32 = arith.constant 8 : i32
      %133 = vector.broadcast %c8_i32 : i32 to vector<8x128xi32>
      %134 = arith.addi %132, %133 : vector<8x128xi32>
      %c8_i32_57 = arith.constant 8 : i32
      %135 = vector.broadcast %c8_i32_57 : i32 to vector<8x128xi32>
      %136 = arith.cmpi sge, %134, %135 : vector<8x128xi32>
      %c11_i32 = arith.constant 11 : i32
      %137 = vector.broadcast %c11_i32 : i32 to vector<8x128xi32>
      %138 = arith.cmpi slt, %134, %137 : vector<8x128xi32>
      %139 = arith.andi %136, %138 : vector<8x128xi1>
      %140 = arith.select %139, %111, %93 : vector<8x128xi1>, vector<8x128xf32>
      %141 = arith.select %139, %121, %94 : vector<8x128xi1>, vector<8x128xf32>
      %142 = arith.select %139, %131, %95 : vector<8x128xi1>, vector<8x128xf32>
      %c8_58 = arith.constant 8 : index
      %c0_59 = arith.constant 0 : index
      %143 = vector.load %arg4[%c8_58, %c0_59] : memref<16x128xf32, #tpu.memory_space<vmem>>, vector<8x128xf32>
      tpu.vector_store %arg4[%c8_58, %c0_59], %140 {strides = array<i32>} : memref<16x128xf32, #tpu.memory_space<vmem>>, vector<8x128xf32>,
      %c8_60 = arith.constant 8 : index
      %c0_61 = arith.constant 0 : index
      %144 = vector.load %arg5[%c8_60, %c0_61] : memref<16x128xf32, #tpu.memory_space<vmem>>, vector<8x128xf32>
      tpu.vector_store %arg5[%c8_60, %c0_61], %141 {strides = array<i32>} : memref<16x128xf32, #tpu.memory_space<vmem>>, vector<8x128xf32>,
      %c8_62 = arith.constant 8 : index
      %c0_63 = arith.constant 0 : index
      %145 = vector.load %arg6[%c8_62, %c0_63] : memref<16x128xf32, #tpu.memory_space<vmem>>, vector<8x128xf32>
      tpu.vector_store %arg6[%c8_62, %c0_63], %142 {strides = array<i32>} : memref<16x128xf32, #tpu.memory_space<vmem>>, vector<8x128xf32>,
      %146 = vector.extract_strided_slice %35 {offsets = [4, 0], sizes = [1, 128], strides = [1, 1]} : vector<6x128xf32> to vector<1x128xf32>
      %147 = vector.extract_strided_slice %36 {offsets = [4, 0], sizes = [1, 128], strides = [1, 1]} : vector<6x128xf32> to vector<1x128xf32>
      %c8_64 = arith.constant 8 : index
      %c0_65 = arith.constant 0 : index
      %148 = vector.load %arg4[%c8_64, %c0_65] : memref<16x128xf32, #tpu.memory_space<vmem>>, vector<1x128xf32>
      %c8_66 = arith.constant 8 : index
      %c0_67 = arith.constant 0 : index
      %149 = vector.load %arg5[%c8_66, %c0_67] : memref<16x128xf32, #tpu.memory_space<vmem>>, vector<1x128xf32>
      %c8_68 = arith.constant 8 : index
      %c0_69 = arith.constant 0 : index
      %150 = vector.load %arg6[%c8_68, %c0_69] : memref<16x128xf32, #tpu.memory_space<vmem>>, vector<1x128xf32>
      %c9 = arith.constant 9 : index
      %c0_70 = arith.constant 0 : index
      %151 = vector.load %arg4[%c9, %c0_70] : memref<16x128xf32, #tpu.memory_space<vmem>>, vector<1x128xf32>
      %152 = arith.subf %151, %148 : vector<1x128xf32>
      %c9_71 = arith.constant 9 : index
      %c0_72 = arith.constant 0 : index
      %153 = vector.load %arg5[%c9_71, %c0_72] : memref<16x128xf32, #tpu.memory_space<vmem>>, vector<1x128xf32>
      %154 = arith.subf %153, %149 : vector<1x128xf32>
      %c9_73 = arith.constant 9 : index
      %c0_74 = arith.constant 0 : index
      %155 = vector.load %arg6[%c9_73, %c0_74] : memref<16x128xf32, #tpu.memory_space<vmem>>, vector<1x128xf32>
      %156 = arith.subf %155, %150 : vector<1x128xf32>
      %157 = arith.mulf %152, %152 : vector<1x128xf32>
      %158 = arith.mulf %154, %154 : vector<1x128xf32>
      %159 = arith.addf %157, %158 : vector<1x128xf32>
      %160 = arith.mulf %156, %156 : vector<1x128xf32>
      %161 = arith.addf %159, %160 : vector<1x128xf32>
      %162 = math.rsqrt %161 : vector<1x128xf32>
      %cst_75 = arith.constant 5.000000e-01 : f32
      %163 = vector.broadcast %cst_75 : f32 to vector<1x128xf32>
      %164 = arith.mulf %163, %161 : vector<1x128xf32>
      %165 = arith.mulf %164, %162 : vector<1x128xf32>
      %166 = arith.mulf %165, %162 : vector<1x128xf32>
      %cst_76 = arith.constant 1.500000e+00 : f32
      %167 = vector.broadcast %cst_76 : f32 to vector<1x128xf32>
      %168 = arith.subf %167, %166 : vector<1x128xf32>
      %169 = arith.mulf %162, %168 : vector<1x128xf32>
      %170 = arith.mulf %152, %169 : vector<1x128xf32>
      %171 = arith.mulf %154, %169 : vector<1x128xf32>
      %172 = arith.mulf %156, %169 : vector<1x128xf32>
      %cst_77 = arith.constant 1.000000e+00 : f32
      %173 = vector.broadcast %cst_77 : f32 to vector<1x128xf32>
      %174 = arith.subf %173, %146 : vector<1x128xf32>
      %175 = arith.mulf %170, %174 : vector<1x128xf32>
      %176 = arith.mulf %171, %174 : vector<1x128xf32>
      %177 = arith.mulf %172, %174 : vector<1x128xf32>
      %178 = arith.mulf %170, %147 : vector<1x128xf32>
      %179 = arith.mulf %171, %147 : vector<1x128xf32>
      %180 = arith.mulf %172, %147 : vector<1x128xf32>
      %181 = arith.mulf %170, %175 : vector<1x128xf32>
      %182 = arith.addf %146, %181 : vector<1x128xf32>
      %183 = arith.mulf %170, %176 : vector<1x128xf32>
      %184 = arith.subf %183, %180 : vector<1x128xf32>
      %185 = arith.mulf %170, %177 : vector<1x128xf32>
      %186 = arith.addf %185, %179 : vector<1x128xf32>
      %187 = arith.mulf %171, %175 : vector<1x128xf32>
      %188 = arith.addf %187, %180 : vector<1x128xf32>
      %189 = arith.mulf %171, %176 : vector<1x128xf32>
      %190 = arith.addf %146, %189 : vector<1x128xf32>
      %191 = arith.mulf %171, %177 : vector<1x128xf32>
      %192 = arith.subf %191, %178 : vector<1x128xf32>
      %193 = arith.mulf %172, %175 : vector<1x128xf32>
      %194 = arith.subf %193, %179 : vector<1x128xf32>
      %195 = arith.mulf %172, %176 : vector<1x128xf32>
      %196 = arith.addf %195, %178 : vector<1x128xf32>
      %197 = arith.mulf %172, %177 : vector<1x128xf32>
      %198 = arith.addf %146, %197 : vector<1x128xf32>
      %c8_78 = arith.constant 8 : index
      %c0_79 = arith.constant 0 : index
      %199 = vector.load %arg4[%c8_78, %c0_79] : memref<16x128xf32, #tpu.memory_space<vmem>>, vector<8x128xf32>
      %c8_80 = arith.constant 8 : index
      %c0_81 = arith.constant 0 : index
      %200 = vector.load %arg5[%c8_80, %c0_81] : memref<16x128xf32, #tpu.memory_space<vmem>>, vector<8x128xf32>
      %c8_82 = arith.constant 8 : index
      %c0_83 = arith.constant 0 : index
      %201 = vector.load %arg6[%c8_82, %c0_83] : memref<16x128xf32, #tpu.memory_space<vmem>>, vector<8x128xf32>
      %202 = vector.broadcast %148 : vector<1x128xf32> to vector<8x128xf32>
      %203 = arith.subf %199, %202 : vector<8x128xf32>
      %204 = vector.broadcast %149 : vector<1x128xf32> to vector<8x128xf32>
      %205 = arith.subf %200, %204 : vector<8x128xf32>
      %206 = vector.broadcast %150 : vector<1x128xf32> to vector<8x128xf32>
      %207 = arith.subf %201, %206 : vector<8x128xf32>
      %208 = vector.broadcast %182 : vector<1x128xf32> to vector<8x128xf32>
      %209 = arith.mulf %208, %203 : vector<8x128xf32>
      %210 = vector.broadcast %184 : vector<1x128xf32> to vector<8x128xf32>
      %211 = arith.mulf %210, %205 : vector<8x128xf32>
      %212 = arith.addf %209, %211 : vector<8x128xf32>
      %213 = vector.broadcast %186 : vector<1x128xf32> to vector<8x128xf32>
      %214 = arith.mulf %213, %207 : vector<8x128xf32>
      %215 = arith.addf %212, %214 : vector<8x128xf32>
      %216 = vector.broadcast %148 : vector<1x128xf32> to vector<8x128xf32>
      %217 = arith.addf %215, %216 : vector<8x128xf32>
      %218 = vector.broadcast %188 : vector<1x128xf32> to vector<8x128xf32>
      %219 = arith.mulf %218, %203 : vector<8x128xf32>
      %220 = vector.broadcast %190 : vector<1x128xf32> to vector<8x128xf32>
      %221 = arith.mulf %220, %205 : vector<8x128xf32>
      %222 = arith.addf %219, %221 : vector<8x128xf32>
      %223 = vector.broadcast %192 : vector<1x128xf32> to vector<8x128xf32>
      %224 = arith.mulf %223, %207 : vector<8x128xf32>
      %225 = arith.addf %222, %224 : vector<8x128xf32>
      %226 = vector.broadcast %149 : vector<1x128xf32> to vector<8x128xf32>
      %227 = arith.addf %225, %226 : vector<8x128xf32>
      %228 = vector.broadcast %194 : vector<1x128xf32> to vector<8x128xf32>
      %229 = arith.mulf %228, %203 : vector<8x128xf32>
      %230 = vector.broadcast %196 : vector<1x128xf32> to vector<8x128xf32>
      %231 = arith.mulf %230, %205 : vector<8x128xf32>
      %232 = arith.addf %229, %231 : vector<8x128xf32>
      %233 = vector.broadcast %198 : vector<1x128xf32> to vector<8x128xf32>
      %234 = arith.mulf %233, %207 : vector<8x128xf32>
      %235 = arith.addf %232, %234 : vector<8x128xf32>
      %236 = vector.broadcast %150 : vector<1x128xf32> to vector<8x128xf32>
      %237 = arith.addf %235, %236 : vector<8x128xf32>
      %238 = tpu.iota {dimensions = array<i32: 0>} : vector<8x128xi32>
      %c8_i32_84 = arith.constant 8 : i32
      %239 = vector.broadcast %c8_i32_84 : i32 to vector<8x128xi32>
      %240 = arith.addi %238, %239 : vector<8x128xi32>
      %c9_i32 = arith.constant 9 : i32
      %241 = vector.broadcast %c9_i32 : i32 to vector<8x128xi32>
      %242 = arith.cmpi sge, %240, %241 : vector<8x128xi32>
      %c11_i32_85 = arith.constant 11 : i32
      %243 = vector.broadcast %c11_i32_85 : i32 to vector<8x128xi32>
      %244 = arith.cmpi slt, %240, %243 : vector<8x128xi32>
      %245 = arith.andi %242, %244 : vector<8x128xi1>
      %246 = arith.select %245, %217, %199 : vector<8x128xi1>, vector<8x128xf32>
      %247 = arith.select %245, %227, %200 : vector<8x128xi1>, vector<8x128xf32>
      %248 = arith.select %245, %237, %201 : vector<8x128xi1>, vector<8x128xf32>
      %c8_86 = arith.constant 8 : index
      %c0_87 = arith.constant 0 : index
      %249 = vector.load %arg4[%c8_86, %c0_87] : memref<16x128xf32, #tpu.memory_space<vmem>>, vector<8x128xf32>
      tpu.vector_store %arg4[%c8_86, %c0_87], %246 {strides = array<i32>} : memref<16x128xf32, #tpu.memory_space<vmem>>, vector<8x128xf32>,
      %c8_88 = arith.constant 8 : index
      %c0_89 = arith.constant 0 : index
      %250 = vector.load %arg5[%c8_88, %c0_89] : memref<16x128xf32, #tpu.memory_space<vmem>>, vector<8x128xf32>
      tpu.vector_store %arg5[%c8_88, %c0_89], %247 {strides = array<i32>} : memref<16x128xf32, #tpu.memory_space<vmem>>, vector<8x128xf32>,
      %c8_90 = arith.constant 8 : index
      %c0_91 = arith.constant 0 : index
      %251 = vector.load %arg6[%c8_90, %c0_91] : memref<16x128xf32, #tpu.memory_space<vmem>>, vector<8x128xf32>
      tpu.vector_store %arg6[%c8_90, %c0_91], %248 {strides = array<i32>} : memref<16x128xf32, #tpu.memory_space<vmem>>, vector<8x128xf32>,
      %252 = vector.extract_strided_slice %35 {offsets = [5, 0], sizes = [1, 128], strides = [1, 1]} : vector<6x128xf32> to vector<1x128xf32>
      %253 = vector.extract_strided_slice %36 {offsets = [5, 0], sizes = [1, 128], strides = [1, 1]} : vector<6x128xf32> to vector<1x128xf32>
      %cst_92 = arith.constant 0.40015614 : f32
      %254 = vector.broadcast %cst_92 : f32 to vector<1x128xf32>
      %255 = arith.mulf %254, %252 : vector<1x128xf32>
      %cst_93 = arith.constant 0.59984386 : f32
      %256 = vector.broadcast %cst_93 : f32 to vector<1x128xf32>
      %257 = arith.addf %256, %255 : vector<1x128xf32>
      %cst_94 = arith.constant 0.217784122 : f32
      %258 = vector.broadcast %cst_94 : f32 to vector<1x128xf32>
      %259 = arith.mulf %258, %252 : vector<1x128xf32>
      %cst_95 = arith.constant -0.217784122 : f32
      %260 = vector.broadcast %cst_95 : f32 to vector<1x128xf32>
      %261 = arith.addf %260, %259 : vector<1x128xf32>
      %cst_96 = arith.constant 0.566644251 : f32
      %262 = vector.broadcast %cst_96 : f32 to vector<1x128xf32>
      %263 = arith.mulf %262, %253 : vector<1x128xf32>
      %264 = arith.addf %261, %263 : vector<1x128xf32>
      %cst_97 = arith.constant 0.438863635 : f32
      %265 = vector.broadcast %cst_97 : f32 to vector<1x128xf32>
      %266 = arith.mulf %265, %252 : vector<1x128xf32>
      %cst_98 = arith.constant -0.438863635 : f32
      %267 = vector.broadcast %cst_98 : f32 to vector<1x128xf32>
      %268 = arith.addf %267, %266 : vector<1x128xf32>
      %cst_99 = arith.constant -0.281194687 : f32
      %269 = vector.broadcast %cst_99 : f32 to vector<1x128xf32>
      %270 = arith.mulf %269, %253 : vector<1x128xf32>
      %271 = arith.addf %268, %270 : vector<1x128xf32>
      %cst_100 = arith.constant 0.217784122 : f32
      %272 = vector.broadcast %cst_100 : f32 to vector<1x128xf32>
      %273 = arith.mulf %272, %252 : vector<1x128xf32>
      %cst_101 = arith.constant -0.217784122 : f32
      %274 = vector.broadcast %cst_101 : f32 to vector<1x128xf32>
      %275 = arith.addf %274, %273 : vector<1x128xf32>
      %cst_102 = arith.constant -0.566644251 : f32
      %276 = vector.broadcast %cst_102 : f32 to vector<1x128xf32>
      %277 = arith.mulf %276, %253 : vector<1x128xf32>
      %278 = arith.addf %275, %277 : vector<1x128xf32>
      %cst_103 = arith.constant 0.920929551 : f32
      %279 = vector.broadcast %cst_103 : f32 to vector<1x128xf32>
      %280 = arith.mulf %279, %252 : vector<1x128xf32>
      %cst_104 = arith.constant 0.0790704489 : f32
      %281 = vector.broadcast %cst_104 : f32 to vector<1x128xf32>
      %282 = arith.addf %281, %280 : vector<1x128xf32>
      %cst_105 = arith.constant -0.159337342 : f32
      %283 = vector.broadcast %cst_105 : f32 to vector<1x128xf32>
      %284 = arith.mulf %283, %252 : vector<1x128xf32>
      %cst_106 = arith.constant 0.159337342 : f32
      %285 = vector.broadcast %cst_106 : f32 to vector<1x128xf32>
      %286 = arith.addf %285, %284 : vector<1x128xf32>
      %cst_107 = arith.constant -0.774495899 : f32
      %287 = vector.broadcast %cst_107 : f32 to vector<1x128xf32>
      %288 = arith.mulf %287, %253 : vector<1x128xf32>
      %289 = arith.addf %286, %288 : vector<1x128xf32>
      %cst_108 = arith.constant 0.438863635 : f32
      %290 = vector.broadcast %cst_108 : f32 to vector<1x128xf32>
      %291 = arith.mulf %290, %252 : vector<1x128xf32>
      %cst_109 = arith.constant -0.438863635 : f32
      %292 = vector.broadcast %cst_109 : f32 to vector<1x128xf32>
      %293 = arith.addf %292, %291 : vector<1x128xf32>
      %cst_110 = arith.constant 0.281194687 : f32
      %294 = vector.broadcast %cst_110 : f32 to vector<1x128xf32>
      %295 = arith.mulf %294, %253 : vector<1x128xf32>
      %296 = arith.addf %293, %295 : vector<1x128xf32>
      %cst_111 = arith.constant -0.159337342 : f32
      %297 = vector.broadcast %cst_111 : f32 to vector<1x128xf32>
      %298 = arith.mulf %297, %252 : vector<1x128xf32>
      %cst_112 = arith.constant 0.159337342 : f32
      %299 = vector.broadcast %cst_112 : f32 to vector<1x128xf32>
      %300 = arith.addf %299, %298 : vector<1x128xf32>
      %cst_113 = arith.constant 0.774495899 : f32
      %301 = vector.broadcast %cst_113 : f32 to vector<1x128xf32>
      %302 = arith.mulf %301, %253 : vector<1x128xf32>
      %303 = arith.addf %300, %302 : vector<1x128xf32>
      %cst_114 = arith.constant 0.678914309 : f32
      %304 = vector.broadcast %cst_114 : f32 to vector<1x128xf32>
      %305 = arith.mulf %304, %252 : vector<1x128xf32>
      %cst_115 = arith.constant 0.321085691 : f32
      %306 = vector.broadcast %cst_115 : f32 to vector<1x128xf32>
      %307 = arith.addf %306, %305 : vector<1x128xf32>
      %c8_116 = arith.constant 8 : index
      %c0_117 = arith.constant 0 : index
      %308 = vector.load %arg4[%c8_116, %c0_117] : memref<16x128xf32, #tpu.memory_space<vmem>>, vector<8x128xf32>
      %c8_118 = arith.constant 8 : index
      %c0_119 = arith.constant 0 : index
      %309 = vector.load %arg5[%c8_118, %c0_119] : memref<16x128xf32, #tpu.memory_space<vmem>>, vector<8x128xf32>
      %c8_120 = arith.constant 8 : index
      %c0_121 = arith.constant 0 : index
      %310 = vector.load %arg6[%c8_120, %c0_121] : memref<16x128xf32, #tpu.memory_space<vmem>>, vector<8x128xf32>
      %cst_122 = arith.constant -2.3176477 : f32
      %311 = vector.broadcast %cst_122 : f32 to vector<8x128xf32>
      %312 = arith.subf %308, %311 : vector<8x128xf32>
      %cst_123 = arith.constant -1.08648264 : f32
      %313 = vector.broadcast %cst_123 : f32 to vector<8x128xf32>
      %314 = arith.subf %309, %313 : vector<8x128xf32>
      %cst_124 = arith.constant 1.61566079 : f32
      %315 = vector.broadcast %cst_124 : f32 to vector<8x128xf32>
      %316 = arith.subf %310, %315 : vector<8x128xf32>
      %317 = vector.broadcast %257 : vector<1x128xf32> to vector<8x128xf32>
      %318 = arith.mulf %317, %312 : vector<8x128xf32>
      %319 = vector.broadcast %264 : vector<1x128xf32> to vector<8x128xf32>
      %320 = arith.mulf %319, %314 : vector<8x128xf32>
      %321 = arith.addf %318, %320 : vector<8x128xf32>
      %322 = vector.broadcast %271 : vector<1x128xf32> to vector<8x128xf32>
      %323 = arith.mulf %322, %316 : vector<8x128xf32>
      %324 = arith.addf %321, %323 : vector<8x128xf32>
      %cst_125 = arith.constant -2.3176477 : f32
      %325 = vector.broadcast %cst_125 : f32 to vector<8x128xf32>
      %326 = arith.addf %324, %325 : vector<8x128xf32>
      %327 = vector.broadcast %278 : vector<1x128xf32> to vector<8x128xf32>
      %328 = arith.mulf %327, %312 : vector<8x128xf32>
      %329 = vector.broadcast %282 : vector<1x128xf32> to vector<8x128xf32>
      %330 = arith.mulf %329, %314 : vector<8x128xf32>
      %331 = arith.addf %328, %330 : vector<8x128xf32>
      %332 = vector.broadcast %289 : vector<1x128xf32> to vector<8x128xf32>
      %333 = arith.mulf %332, %316 : vector<8x128xf32>
      %334 = arith.addf %331, %333 : vector<8x128xf32>
      %cst_126 = arith.constant -1.08648264 : f32
      %335 = vector.broadcast %cst_126 : f32 to vector<8x128xf32>
      %336 = arith.addf %334, %335 : vector<8x128xf32>
      %337 = vector.broadcast %296 : vector<1x128xf32> to vector<8x128xf32>
      %338 = arith.mulf %337, %312 : vector<8x128xf32>
      %339 = vector.broadcast %303 : vector<1x128xf32> to vector<8x128xf32>
      %340 = arith.mulf %339, %314 : vector<8x128xf32>
      %341 = arith.addf %338, %340 : vector<8x128xf32>
      %342 = vector.broadcast %307 : vector<1x128xf32> to vector<8x128xf32>
      %343 = arith.mulf %342, %316 : vector<8x128xf32>
      %344 = arith.addf %341, %343 : vector<8x128xf32>
      %cst_127 = arith.constant 1.61566079 : f32
      %345 = vector.broadcast %cst_127 : f32 to vector<8x128xf32>
      %346 = arith.addf %344, %345 : vector<8x128xf32>
      %347 = tpu.iota {dimensions = array<i32: 0>} : vector<8x128xi32>
      %c8_i32_128 = arith.constant 8 : i32
      %348 = vector.broadcast %c8_i32_128 : i32 to vector<8x128xi32>
      %349 = arith.addi %347, %348 : vector<8x128xi32>
      %c11_i32_129 = arith.constant 11 : i32
      %350 = vector.broadcast %c11_i32_129 : i32 to vector<8x128xi32>
      %351 = arith.cmpi sge, %349, %350 : vector<8x128xi32>
      %c16_i32 = arith.constant 16 : i32
      %352 = vector.broadcast %c16_i32 : i32 to vector<8x128xi32>
      %353 = arith.cmpi slt, %349, %352 : vector<8x128xi32>
      %354 = arith.andi %351, %353 : vector<8x128xi1>
      %355 = arith.select %354, %326, %308 : vector<8x128xi1>, vector<8x128xf32>
      %356 = arith.select %354, %336, %309 : vector<8x128xi1>, vector<8x128xf32>
      %357 = arith.select %354, %346, %310 : vector<8x128xi1>, vector<8x128xf32>
      %c8_130 = arith.constant 8 : index
      %c0_131 = arith.constant 0 : index
      %358 = vector.load %arg4[%c8_130, %c0_131] : memref<16x128xf32, #tpu.memory_space<vmem>>, vector<8x128xf32>
      tpu.vector_store %arg4[%c8_130, %c0_131], %355 {strides = array<i32>} : memref<16x128xf32, #tpu.memory_space<vmem>>, vector<8x128xf32>,
      %c8_132 = arith.constant 8 : index
      %c0_133 = arith.constant 0 : index
      %359 = vector.load %arg5[%c8_132, %c0_133] : memref<16x128xf32, #tpu.memory_space<vmem>>, vector<8x128xf32>
      tpu.vector_store %arg5[%c8_132, %c0_133], %356 {strides = array<i32>} : memref<16x128xf32, #tpu.memory_space<vmem>>, vector<8x128xf32>,
      %c8_134 = arith.constant 8 : index
      %c0_135 = arith.constant 0 : index
      %360 = vector.load %arg6[%c8_134, %c0_135] : memref<16x128xf32, #tpu.memory_space<vmem>>, vector<8x128xf32>
      tpu.vector_store %arg6[%c8_134, %c0_135], %357 {strides = array<i32>} : memref<16x128xf32, #tpu.memory_space<vmem>>, vector<8x128xf32>,
      %361 = vector.extract_strided_slice %35 {offsets = [0, 0], sizes = [1, 128], strides = [1, 1]} : vector<6x128xf32> to vector<1x128xf32>
      %362 = vector.extract_strided_slice %35 {offsets = [1, 0], sizes = [1, 128], strides = [1, 1]} : vector<6x128xf32> to vector<1x128xf32>
      %363 = vector.extract_strided_slice %35 {offsets = [2, 0], sizes = [1, 128], strides = [1, 1]} : vector<6x128xf32> to vector<1x128xf32>
      %364 = vector.extract_strided_slice %36 {offsets = [0, 0], sizes = [1, 128], strides = [1, 1]} : vector<6x128xf32> to vector<1x128xf32>
      %365 = vector.extract_strided_slice %36 {offsets = [1, 0], sizes = [1, 128], strides = [1, 1]} : vector<6x128xf32> to vector<1x128xf32>
      %366 = vector.extract_strided_slice %36 {offsets = [2, 0], sizes = [1, 128], strides = [1, 1]} : vector<6x128xf32> to vector<1x128xf32>
      %367 = arith.mulf %362, %363 : vector<1x128xf32>
      %368 = arith.mulf %365, %366 : vector<1x128xf32>
      %369 = arith.mulf %365, %363 : vector<1x128xf32>
      %370 = arith.mulf %362, %366 : vector<1x128xf32>
      %371 = arith.mulf %361, %367 : vector<1x128xf32>
      %372 = arith.mulf %364, %368 : vector<1x128xf32>
      %373 = arith.addf %371, %372 : vector<1x128xf32>
      %374 = arith.mulf %364, %367 : vector<1x128xf32>
      %375 = arith.mulf %361, %368 : vector<1x128xf32>
      %376 = arith.subf %374, %375 : vector<1x128xf32>
      %377 = arith.mulf %361, %369 : vector<1x128xf32>
      %378 = arith.mulf %364, %370 : vector<1x128xf32>
      %379 = arith.addf %377, %378 : vector<1x128xf32>
      %380 = arith.mulf %361, %370 : vector<1x128xf32>
      %381 = arith.mulf %364, %369 : vector<1x128xf32>
      %382 = arith.subf %380, %381 : vector<1x128xf32>
      %383 = arith.mulf %376, %376 : vector<1x128xf32>
      %384 = arith.mulf %379, %379 : vector<1x128xf32>
      %385 = arith.mulf %382, %382 : vector<1x128xf32>
      %386 = arith.mulf %376, %379 : vector<1x128xf32>
      %387 = arith.mulf %376, %382 : vector<1x128xf32>
      %388 = arith.mulf %379, %382 : vector<1x128xf32>
      %389 = arith.mulf %373, %376 : vector<1x128xf32>
      %390 = arith.mulf %373, %379 : vector<1x128xf32>
      %391 = arith.mulf %373, %382 : vector<1x128xf32>
      %392 = arith.addf %384, %385 : vector<1x128xf32>
      %cst_136 = arith.constant 2.000000e+00 : f32
      %393 = vector.broadcast %cst_136 : f32 to vector<1x128xf32>
      %394 = arith.mulf %393, %392 : vector<1x128xf32>
      %cst_137 = arith.constant 1.000000e+00 : f32
      %395 = vector.broadcast %cst_137 : f32 to vector<1x128xf32>
      %396 = arith.subf %395, %394 : vector<1x128xf32>
      %397 = arith.subf %386, %391 : vector<1x128xf32>
      %cst_138 = arith.constant 2.000000e+00 : f32
      %398 = vector.broadcast %cst_138 : f32 to vector<1x128xf32>
      %399 = arith.mulf %398, %397 : vector<1x128xf32>
      %400 = arith.addf %387, %390 : vector<1x128xf32>
      %cst_139 = arith.constant 2.000000e+00 : f32
      %401 = vector.broadcast %cst_139 : f32 to vector<1x128xf32>
      %402 = arith.mulf %401, %400 : vector<1x128xf32>
      %403 = arith.addf %386, %391 : vector<1x128xf32>
      %cst_140 = arith.constant 2.000000e+00 : f32
      %404 = vector.broadcast %cst_140 : f32 to vector<1x128xf32>
      %405 = arith.mulf %404, %403 : vector<1x128xf32>
      %406 = arith.addf %383, %385 : vector<1x128xf32>
      %cst_141 = arith.constant 2.000000e+00 : f32
      %407 = vector.broadcast %cst_141 : f32 to vector<1x128xf32>
      %408 = arith.mulf %407, %406 : vector<1x128xf32>
      %cst_142 = arith.constant 1.000000e+00 : f32
      %409 = vector.broadcast %cst_142 : f32 to vector<1x128xf32>
      %410 = arith.subf %409, %408 : vector<1x128xf32>
      %411 = arith.subf %388, %389 : vector<1x128xf32>
      %cst_143 = arith.constant 2.000000e+00 : f32
      %412 = vector.broadcast %cst_143 : f32 to vector<1x128xf32>
      %413 = arith.mulf %412, %411 : vector<1x128xf32>
      %414 = arith.subf %387, %390 : vector<1x128xf32>
      %cst_144 = arith.constant 2.000000e+00 : f32
      %415 = vector.broadcast %cst_144 : f32 to vector<1x128xf32>
      %416 = arith.mulf %415, %414 : vector<1x128xf32>
      %417 = arith.addf %388, %389 : vector<1x128xf32>
      %cst_145 = arith.constant 2.000000e+00 : f32
      %418 = vector.broadcast %cst_145 : f32 to vector<1x128xf32>
      %419 = arith.mulf %418, %417 : vector<1x128xf32>
      %420 = arith.addf %383, %384 : vector<1x128xf32>
      %cst_146 = arith.constant 2.000000e+00 : f32
      %421 = vector.broadcast %cst_146 : f32 to vector<1x128xf32>
      %422 = arith.mulf %421, %420 : vector<1x128xf32>
      %cst_147 = arith.constant 1.000000e+00 : f32
      %423 = vector.broadcast %cst_147 : f32 to vector<1x128xf32>
      %424 = arith.subf %423, %422 : vector<1x128xf32>
      %c0_148 = arith.constant 0 : index
      %425 = arith.index_cast %14 : i32 to index
      %426 = vector.load %arg1[%c0_148, %425] : memref<9x256xf32, #tpu.memory_space<vmem>>, vector<1x128xf32>
      %c1_149 = arith.constant 1 : index
      %427 = arith.index_cast %14 : i32 to index
      %428 = vector.load %arg1[%c1_149, %427] : memref<9x256xf32, #tpu.memory_space<vmem>>, vector<1x128xf32>
      %c2_150 = arith.constant 2 : index
      %429 = arith.index_cast %14 : i32 to index
      %430 = vector.load %arg1[%c2_150, %429] : memref<9x256xf32, #tpu.memory_space<vmem>>, vector<1x128xf32>
      %c0_151 = arith.constant 0 : index
      %c0_152 = arith.constant 0 : index
      %431 = vector.load %arg4[%c0_151, %c0_152] : memref<16x128xf32, #tpu.memory_space<vmem>>, vector<8x128xf32>
      %c0_153 = arith.constant 0 : index
      %c0_154 = arith.constant 0 : index
      %432 = vector.load %arg5[%c0_153, %c0_154] : memref<16x128xf32, #tpu.memory_space<vmem>>, vector<8x128xf32>
      %c0_155 = arith.constant 0 : index
      %c0_156 = arith.constant 0 : index
      %433 = vector.load %arg6[%c0_155, %c0_156] : memref<16x128xf32, #tpu.memory_space<vmem>>, vector<8x128xf32>
      %434 = vector.broadcast %396 : vector<1x128xf32> to vector<8x128xf32>
      %435 = arith.mulf %434, %431 : vector<8x128xf32>
      %436 = vector.broadcast %405 : vector<1x128xf32> to vector<8x128xf32>
      %437 = arith.mulf %436, %432 : vector<8x128xf32>
      %438 = arith.addf %435, %437 : vector<8x128xf32>
      %439 = vector.broadcast %416 : vector<1x128xf32> to vector<8x128xf32>
      %440 = arith.mulf %439, %433 : vector<8x128xf32>
      %441 = arith.addf %438, %440 : vector<8x128xf32>
      %442 = vector.broadcast %426 : vector<1x128xf32> to vector<8x128xf32>
      %443 = arith.addf %441, %442 : vector<8x128xf32>
      %c0_157 = arith.constant 0 : index
      %c0_158 = arith.constant 0 : index
      %444 = arith.index_cast %14 : i32 to index
      %445 = vector.load %arg3[%c0_157, %c0_158, %444] : memref<3x16x256xf32, #tpu.memory_space<vmem>>, vector<1x8x128xf32>
      %446 = vector.shape_cast %445 : vector<1x8x128xf32> to vector<8x128xf32>
      %447 = vector.shape_cast %443 : vector<8x128xf32> to vector<1x8x128xf32>
      tpu.vector_store %arg3[%c0_157, %c0_158, %444], %447 {strides = array<i32>} : memref<3x16x256xf32, #tpu.memory_space<vmem>>, vector<1x8x128xf32>,
      %448 = vector.broadcast %399 : vector<1x128xf32> to vector<8x128xf32>
      %449 = arith.mulf %448, %431 : vector<8x128xf32>
      %450 = vector.broadcast %410 : vector<1x128xf32> to vector<8x128xf32>
      %451 = arith.mulf %450, %432 : vector<8x128xf32>
      %452 = arith.addf %449, %451 : vector<8x128xf32>
      %453 = vector.broadcast %419 : vector<1x128xf32> to vector<8x128xf32>
      %454 = arith.mulf %453, %433 : vector<8x128xf32>
      %455 = arith.addf %452, %454 : vector<8x128xf32>
      %456 = vector.broadcast %428 : vector<1x128xf32> to vector<8x128xf32>
      %457 = arith.addf %455, %456 : vector<8x128xf32>
      %c1_159 = arith.constant 1 : index
      %c0_160 = arith.constant 0 : index
      %458 = arith.index_cast %14 : i32 to index
      %459 = vector.load %arg3[%c1_159, %c0_160, %458] : memref<3x16x256xf32, #tpu.memory_space<vmem>>, vector<1x8x128xf32>
      %460 = vector.shape_cast %459 : vector<1x8x128xf32> to vector<8x128xf32>
      %461 = vector.shape_cast %457 : vector<8x128xf32> to vector<1x8x128xf32>
      tpu.vector_store %arg3[%c1_159, %c0_160, %458], %461 {strides = array<i32>} : memref<3x16x256xf32, #tpu.memory_space<vmem>>, vector<1x8x128xf32>,
      %462 = vector.broadcast %402 : vector<1x128xf32> to vector<8x128xf32>
      %463 = arith.mulf %462, %431 : vector<8x128xf32>
      %464 = vector.broadcast %413 : vector<1x128xf32> to vector<8x128xf32>
      %465 = arith.mulf %464, %432 : vector<8x128xf32>
      %466 = arith.addf %463, %465 : vector<8x128xf32>
      %467 = vector.broadcast %424 : vector<1x128xf32> to vector<8x128xf32>
      %468 = arith.mulf %467, %433 : vector<8x128xf32>
      %469 = arith.addf %466, %468 : vector<8x128xf32>
      %470 = vector.broadcast %430 : vector<1x128xf32> to vector<8x128xf32>
      %471 = arith.addf %469, %470 : vector<8x128xf32>
      %c2_161 = arith.constant 2 : index
      %c0_162 = arith.constant 0 : index
      %472 = arith.index_cast %14 : i32 to index
      %473 = vector.load %arg3[%c2_161, %c0_162, %472] : memref<3x16x256xf32, #tpu.memory_space<vmem>>, vector<1x8x128xf32>
      %474 = vector.shape_cast %473 : vector<1x8x128xf32> to vector<8x128xf32>
      %475 = vector.shape_cast %471 : vector<8x128xf32> to vector<1x8x128xf32>
      tpu.vector_store %arg3[%c2_161, %c0_162, %472], %475 {strides = array<i32>} : memref<3x16x256xf32, #tpu.memory_space<vmem>>, vector<1x8x128xf32>,
      %c8_163 = arith.constant 8 : index
      %c0_164 = arith.constant 0 : index
      %476 = vector.load %arg4[%c8_163, %c0_164] : memref<16x128xf32, #tpu.memory_space<vmem>>, vector<8x128xf32>
      %c8_165 = arith.constant 8 : index
      %c0_166 = arith.constant 0 : index
      %477 = vector.load %arg5[%c8_165, %c0_166] : memref<16x128xf32, #tpu.memory_space<vmem>>, vector<8x128xf32>
      %c8_167 = arith.constant 8 : index
      %c0_168 = arith.constant 0 : index
      %478 = vector.load %arg6[%c8_167, %c0_168] : memref<16x128xf32, #tpu.memory_space<vmem>>, vector<8x128xf32>
      %479 = vector.broadcast %396 : vector<1x128xf32> to vector<8x128xf32>
      %480 = arith.mulf %479, %476 : vector<8x128xf32>
      %481 = vector.broadcast %405 : vector<1x128xf32> to vector<8x128xf32>
      %482 = arith.mulf %481, %477 : vector<8x128xf32>
      %483 = arith.addf %480, %482 : vector<8x128xf32>
      %484 = vector.broadcast %416 : vector<1x128xf32> to vector<8x128xf32>
      %485 = arith.mulf %484, %478 : vector<8x128xf32>
      %486 = arith.addf %483, %485 : vector<8x128xf32>
      %487 = vector.broadcast %426 : vector<1x128xf32> to vector<8x128xf32>
      %488 = arith.addf %486, %487 : vector<8x128xf32>
      %c0_169 = arith.constant 0 : index
      %c8_170 = arith.constant 8 : index
      %489 = arith.index_cast %14 : i32 to index
      %490 = vector.load %arg3[%c0_169, %c8_170, %489] : memref<3x16x256xf32, #tpu.memory_space<vmem>>, vector<1x8x128xf32>
      %491 = vector.shape_cast %490 : vector<1x8x128xf32> to vector<8x128xf32>
      %492 = vector.shape_cast %488 : vector<8x128xf32> to vector<1x8x128xf32>
      tpu.vector_store %arg3[%c0_169, %c8_170, %489], %492 {strides = array<i32>} : memref<3x16x256xf32, #tpu.memory_space<vmem>>, vector<1x8x128xf32>,
      %493 = vector.broadcast %399 : vector<1x128xf32> to vector<8x128xf32>
      %494 = arith.mulf %493, %476 : vector<8x128xf32>
      %495 = vector.broadcast %410 : vector<1x128xf32> to vector<8x128xf32>
      %496 = arith.mulf %495, %477 : vector<8x128xf32>
      %497 = arith.addf %494, %496 : vector<8x128xf32>
      %498 = vector.broadcast %419 : vector<1x128xf32> to vector<8x128xf32>
      %499 = arith.mulf %498, %478 : vector<8x128xf32>
      %500 = arith.addf %497, %499 : vector<8x128xf32>
      %501 = vector.broadcast %428 : vector<1x128xf32> to vector<8x128xf32>
      %502 = arith.addf %500, %501 : vector<8x128xf32>
      %c1_171 = arith.constant 1 : index
      %c8_172 = arith.constant 8 : index
      %503 = arith.index_cast %14 : i32 to index
      %504 = vector.load %arg3[%c1_171, %c8_172, %503] : memref<3x16x256xf32, #tpu.memory_space<vmem>>, vector<1x8x128xf32>
      %505 = vector.shape_cast %504 : vector<1x8x128xf32> to vector<8x128xf32>
      %506 = vector.shape_cast %502 : vector<8x128xf32> to vector<1x8x128xf32>
      tpu.vector_store %arg3[%c1_171, %c8_172, %503], %506 {strides = array<i32>} : memref<3x16x256xf32, #tpu.memory_space<vmem>>, vector<1x8x128xf32>,
      %507 = vector.broadcast %402 : vector<1x128xf32> to vector<8x128xf32>
      %508 = arith.mulf %507, %476 : vector<8x128xf32>
      %509 = vector.broadcast %413 : vector<1x128xf32> to vector<8x128xf32>
      %510 = arith.mulf %509, %477 : vector<8x128xf32>
      %511 = arith.addf %508, %510 : vector<8x128xf32>
      %512 = vector.broadcast %424 : vector<1x128xf32> to vector<8x128xf32>
      %513 = arith.mulf %512, %478 : vector<8x128xf32>
      %514 = arith.addf %511, %513 : vector<8x128xf32>
      %515 = vector.broadcast %430 : vector<1x128xf32> to vector<8x128xf32>
      %516 = arith.addf %514, %515 : vector<8x128xf32>
      %c2_173 = arith.constant 2 : index
      %c8_174 = arith.constant 8 : index
      %517 = arith.index_cast %14 : i32 to index
      %518 = vector.load %arg3[%c2_173, %c8_174, %517] : memref<3x16x256xf32, #tpu.memory_space<vmem>>, vector<1x8x128xf32>
      %519 = vector.shape_cast %518 : vector<1x8x128xf32> to vector<8x128xf32>
      %520 = vector.shape_cast %516 : vector<8x128xf32> to vector<1x8x128xf32>
      tpu.vector_store %arg3[%c2_173, %c8_174, %517], %520 {strides = array<i32>} : memref<3x16x256xf32, #tpu.memory_space<vmem>>, vector<1x8x128xf32>,
    }
    %c2_i32_9 = arith.constant 2 : i32
    return
  }
  func.func @transform_0(%arg0: i32) -> (i32, i32) {
    %c0_i32 = arith.constant 0 : i32
    %c0_i32_0 = arith.constant 0 : i32
    return %c0_i32, %arg0 : i32, i32
  }
  func.func @transform_1(%arg0: i32) -> (i32, i32) {
    %c0_i32 = arith.constant 0 : i32
    %c0_i32_0 = arith.constant 0 : i32
    %c0_i32_1 = arith.constant 0 : i32
    return %c0_i32, %c0_i32_0 : i32, i32
  }
  func.func @transform_2(%arg0: i32) -> (i32, i32, i32) {
    %c0_i32 = arith.constant 0 : i32
    %c0_i32_0 = arith.constant 0 : i32
    %c0_i32_1 = arith.constant 0 : i32
    return %c0_i32, %c0_i32_0, %arg0 : i32, i32, i32
  }
}

</mosaic_0001>

<llo_original>
// kernel: tpu_custom_call.1
$region0: #{tpu_custom_call.1}
  #allocation0 [shape = 'u32[]', space=smem, size = 0x4, offset = 0x4, fixed_abs, tag = 'smem constant byte address 0x4 - core index']
  #allocation1 [shape = 'u32[144,128]{1,0:T(1,128)}', space=vmem, size = 0x12000, scoped, tag = 'internal scratch']
  #allocation2 [shape = 'f32[16,128]{1,0:T(8,128)}', space=vmem, size = 0x2000, scoped, tag = 'scratch operand']
  #allocation3 [shape = 'f32[16,128]{1,0:T(8,128)}', space=vmem, size = 0x2000, scoped, tag = 'scratch operand']
  #allocation4 [shape = 'f32[16,128]{1,0:T(8,128)}', space=vmem, size = 0x2000, scoped, tag = 'scratch operand']
  %s0 = inlined_call_operand.hbm [shape: f32[9,256], index: 0, kind: input, shape index: {}]
  %s1 = inlined_call_operand.vmem [shape: f32[16,3], index: 1, kind: input, shape index: {}]
  %s2 = inlined_call_operand.hbm [shape: f32[3,16,256], index: 2, kind: output, shape index: {}]
  %s3 = sld [smem:[#allocation0]]
  $region29: #{tpu_custom_call.1} parent=0
    _
  %s5 = ssub.s32 1, %s3
  %s6 = scalar_select 0, %s5, %s3
  $region1: #{tpu_custom_call.1} parent=0
    #allocation5 [shape = 'u8[16384]{0}', space=vmem, size = 0x4000, scoped, tag = 'input window, operand 0, single buffered']
    #allocation6 [shape = 's32[1]{0}', space=sflag, size = 0x4, scoped, tag = 'scoped memory for tpu_custom_call.1']
    #allocation7 [shape = 's32[1]{0}', space=sflag, size = 0x4, scoped, tag = 'scoped memory for tpu_custom_call.1']
    #allocation8 [shape = 'u8[49152]{0}', space=vmem, size = 0xc000, scoped, tag = 'output window, operand 0, single buffered']
    %7 = vsyncpa [#allocation6], 0
    %8 = vsyncpa [#allocation7], 0
    // Predicated region
    $region2: #{tpu_custom_call.1} parent=1 // pred_check
      _
    $region3: #{tpu_custom_call.1} parent=1 // pred_check_branch
      %10 = sbr.rel (0) target = $region5
    $region4: #{tpu_custom_call.1} parent=1 // pred_region
      %s12 = ssub.s32 512, 512
      %13 = vsyncadd [#allocation6], %s12
      %s14 = sshll.u32 [#allocation5], 4
      %s15 = int_to_ptr.vmem [resolvable:$true] %s14
      %20 = dma.hbm_to_vmem [thread:$0]  %s0, 512, %s15, [#allocation6], 256, 256, 16
    $region5: #{tpu_custom_call.1} parent=1 // pred_fallthru
      _
    // Predicated region
    $region6: #{tpu_custom_call.1} parent=1 // pred_check
      _
    $region7: #{tpu_custom_call.1} parent=1 // pred_check_branch
      %22 = sbr.rel (0) target = $region9
    $region8: #{tpu_custom_call.1} parent=1 // pred_region
      _
    $region9: #{tpu_custom_call.1} parent=1 // pred_fallthru
      _
    // Predicated region
    $region10: #{tpu_custom_call.1} parent=1 // pred_check
      _
    $region11: #{tpu_custom_call.1} parent=1 // pred_check_branch
      %24 = sbr.rel (0) target = $region13
    $region12: #{tpu_custom_call.1} parent=1 // pred_region
      %25 = dma.done [#allocation6], 512
    $region13: #{tpu_custom_call.1} parent=1 // pred_fallthru
      _
    %v26 = vld [vmem:[%s1] sm:$0xff]
    %28 = vset.pattern.permute.xlu0 0
    %29 = vperm.xlu0 %28, %v26
    %v30 = vpop.permute.xlu0 %29
    %32 = vst [vmem:[#allocation2] sm:$0xff] %v30
    %v33 = vld [vmem:[%s1] sm:$0xff]
    %35 = vset.pattern.permute.xlu0 1
    %36 = vperm.xlu0 %35, %v33
    %v37 = vpop.permute.xlu0 %36
    %39 = vst [vmem:[#allocation3] sm:$0xff] %v37
    %v40 = vld [vmem:[%s1] sm:$0xff]
    %42 = vset.pattern.permute.xlu0 2
    %43 = vperm.xlu0 %42, %v40
    %v44 = vpop.permute.xlu0 %43
    %46 = vst [vmem:[#allocation4] sm:$0xff] %v44
    loop: start=0, step=1, limit=2
    $region14: #{tpu_custom_call.1} parent=1 // loop_pre_header
      _
    $region15: #{tpu_custom_call.1} parent=1 // loop_header
      %s48 = sphi 0, %s52
      %p49 = scmp.ge.s32.totalorder %s48, 2
    $region16: #{tpu_custom_call.1} parent=1 // loop_header_branch
      %51 = sbr.rel (%p49) target = $region20
    $region17: #{tpu_custom_call.1} parent=1 // loop_body
      %s53 = smul.u32 %s48, 128
      %v54 = vld [vmem:[%s1 + $0x8] sm:$0xff]
      %56 = vset.pattern.permute.xlu0 0
      %57 = vperm.xlu0 %56, %v54
      %v58 = vpop.permute.xlu0 %57
      %60 = vst [vmem:[#allocation2 + $0x8] sm:$0xff] %v58
      %v61 = vld [vmem:[%s1 + $0x8] sm:$0xff]
      %63 = vset.pattern.permute.xlu0 1
      %64 = vperm.xlu0 %63, %v61
      %v65 = vpop.permute.xlu0 %64
      %67 = vst [vmem:[#allocation3 + $0x8] sm:$0xff] %v65
      %v68 = vld [vmem:[%s1 + $0x8] sm:$0xff]
      %70 = vset.pattern.permute.xlu0 2
      %71 = vperm.xlu0 %70, %v68
      %v72 = vpop.permute.xlu0 %71
      %74 = vst [vmem:[#allocation4 + $0x8] sm:$0xff] %v72
      %s75 = sshra.s32 %s53, 7
      %s76 = sand.u32 %s53, 127
      %s77 = smul.addr %s75, 8
      %s78 = scalar_lea.vmem [#allocation5], %s77
      %v79 = vld [vmem:[%s78] sm:$0xf8]
      %v80 = vld [vmem:[%s78 + $0x10] sm:$0x1]
      %v81 = vlaneseq
      %v82 = vshrl.u32 %v81, 7
      %vm83 = vcmp.lt.s32.totalorder %v82, 3
      %v84 = vmul.f32 %v79, 0.5
      %v85 = vmul.f32 %v80, 0.5
      %vm88 = vcmask 1044480
      %v89 = vrot.slane %v84, 3
      %v90 = vrot.slane %v85, 3
      %v91 = vsel %vm88, %v89, %v90
      %v95 = vrot.slane %v79, 3
      %v96 = vrot.slane %v80, 3
      %v97 = vsel %vm88, %v95, %v96
      %v99 = vsel %vm83, %v91, %v97
      %v100 = vand.u32 2147483647, %v99
      %vm101 = vcmp.le.f32.partialorder %v100, 0.7853982
      %vm102 = vcmp.lt.s32.totalorder %v99, 0
      %v103 = vand.u32 %v99, 2139095040
      %v104 = vshrl.u32 %v103, 23
      %v105 = vsub.s32 %v104, 127
      %v106 = vand.u32 2147483647, %v99
      %v107 = vand.u32 %v106, 8388607
      %v108 = vor.u32 %v107, 8388608
      %v109 = vsub.s32 0, %v108
      %v110 = vadd.s32 %v105, 1
      %vm111 = vcmp.gt.s32.totalorder %v110, 0
      %v112 = vsel %vm111, %v110, 0
      %v113 = vshrl.u32 %v112, 5
      %v114 = vand.u32 %v112, 31
      %v115 = vsub.s32 32, %v114
      %v116 = vshrl.u32 683565275, %v115
      %v117 = vshll.u32 683565275, %v114
      %v118 = vshrl.u32 2475754826, %v115
      %v119 = vor.u32 %v117, %v118
      %v120 = vshll.u32 2475754826, %v114
      %v121 = vshrl.u32 2131351028, %v115
      %v122 = vor.u32 %v120, %v121
      %v123 = vshll.u32 2131351028, %v114
      %v124 = vshrl.u32 2102212464, %v115
      %v125 = vor.u32 %v123, %v124
      %v126 = vshll.u32 2102212464, %v114
      %v127 = vshrl.u32 920167782, %v115
      %v128 = vor.u32 %v126, %v127
      %v129 = vshll.u32 920167782, %v114
      %v130 = vshrl.u32 1326507024, %v115
      %v131 = vor.u32 %v129, %v130
      %vm132 = vcmp.lt.s32.totalorder %v113, 1
      %vm133 = vcmp.lt.s32.totalorder %v113, 2
      %vm134 = vcmp.lt.s32.totalorder %v113, 3
      %vm135 = vcmp.lt.s32.totalorder %v113, 4
      %v136 = vsel %vm132, %v116, %v119
      %v137 = vsel %vm135, %v125, 2102212464
      %v138 = vsel %vm134, %v122, %v137
      %v139 = vsel %vm133, %v136, %v138
      %v140 = vsel %vm132, %v119, %v122
      %v141 = vsel %vm135, %v128, 920167782
      %v142 = vsel %vm134, %v125, %v141
      %v143 = vsel %vm133, %v140, %v142
      %v144 = vsel %vm132, %v122, %v125
      %v145 = vsel %vm135, %v131, 1326507024
      %v146 = vsel %vm134, %v128, %v145
      %v147 = vsel %vm133, %v144, %v146
      %v148 = vshll.u32 %v108, 8
      %v149 = vmul.u32.u64.compose %v148, %v147
      %v150 = vextract.low.u32 %v149
      %v151 = vextract.high.u32 %v149
      %v152 = vmul.u32.u64.compose %v148, %v143
      %v153 = vextract.low.u32 %v152
      %v154 = vextract.high.u32 %v152
      %v155 = vmul.u32 %v148, %v139
      %v156 = vadd.s32 %v151, %v153
      %vm157 = vc.u32 %v151, %v153
      %v158 = vadd.s32 %v154, 1
      %v159 = vsel %vm157, %v158, %v154
      %v160 = vadd.s32 %v155, %v159
      %v161 = vadd.s32 %v160, 536870912
      %v162 = vshrl.u32 %v161, 30
      %v163 = vshll.u32 %v162, 30
      %v164 = vsub.s32 %v160, %v163
      %vm165 = vcmp.lt.s32.totalorder %v164, 0
      %v166 = vsub.s32 0, %v164
      %v167 = vsel %vm165, %v166, %v164
      %v168 = vclz %v167
      %v169 = vsub.s32 %v168, 2
      %vm170 = vcmp.gt.s32.totalorder 0, %v169
      %v171 = vsel %vm170, 0, %v169
      %v172 = vsub.s32 32, %v171
      %v173 = vshll.u32 %v164, %v171
      %v174 = vshrl.u32 %v156, %v172
      %v175 = vor.u32 %v173, %v174
      %v176 = vsub.s32 4294967266, %v171
      %v177 = vadd.s32 %v176, 127
      %v178 = vshll.u32 %v177, 23
      %v179 = vor.u32 4788187, %v178
      %v180 = vand.u32 2147483647, %v179
      %v182 = vcvt.s32.f32 %v175
      %v183 = vmul.f32 %v182, %v180
      %v184 = vxor.u32 %v183, 2147483648
      %v185 = vsel %vm102, %v184, %v183
      %v186 = vsub.s32 4, %v162
      %v187 = vsel %vm102, %v186, %v162
      %v188 = vsel %vm101, %v99, %v185
      %v189 = vsel %vm101, 0, %v187
      %v190 = vcosq.f32.pop %v188
      %v191 = vsinq.f32.pop %v188
      %vm192 = vweird.f32 %v99
      %v193 = vand.u32 %v189, 3
      %vm194 = vcmp.lt.s32.totalorder %v193, 2
      %vm195 = vcmp.eq.s32.totalorder %v193, 0
      %v196 = vxor.u32 %v191, 2147483648
      %v197 = vsel %vm195, %v190, %v196
      %vm198 = vcmp.eq.s32.totalorder %v193, 2
      %v199 = vxor.u32 %v190, 2147483648
      %v200 = vsel %vm198, %v199, %v191
      %v201 = vsel %vm194, %v197, %v200
      %v202 = vsel %vm192, nan, %v201
      %v203 = vand.u32 2147483647, %v99
      %vm204 = vcmp.le.f32.partialorder %v203, 0.7853982
      %vm205 = vcmp.lt.s32.totalorder %v99, 0
      %v206 = vand.u32 %v99, 2139095040
      %v207 = vshrl.u32 %v206, 23
      %v208 = vsub.s32 %v207, 127
      %v209 = vand.u32 2147483647, %v99
      %v210 = vand.u32 %v209, 8388607
      %v211 = vor.u32 %v210, 8388608
      %v212 = vsub.s32 0, %v211
      %v213 = vadd.s32 %v208, 1
      %vm214 = vcmp.gt.s32.totalorder %v213, 0
      %v215 = vsel %vm214, %v213, 0
      %v216 = vshrl.u32 %v215, 5
      %v217 = vand.u32 %v215, 31
      %v218 = vsub.s32 32, %v217
      %v219 = vshrl.u32 683565275, %v218
      %v220 = vshll.u32 683565275, %v217
      %v221 = vshrl.u32 2475754826, %v218
      %v222 = vor.u32 %v220, %v221
      %v223 = vshll.u32 2475754826, %v217
      %v224 = vshrl.u32 2131351028, %v218
      %v225 = vor.u32 %v223, %v224
      %v226 = vshll.u32 2131351028, %v217
      %v227 = vshrl.u32 2102212464, %v218
      %v228 = vor.u32 %v226, %v227
      %v229 = vshll.u32 2102212464, %v217
      %v230 = vshrl.u32 920167782, %v218
      %v231 = vor.u32 %v229, %v230
      %v232 = vshll.u32 920167782, %v217
      %v233 = vshrl.u32 1326507024, %v218
      %v234 = vor.u32 %v232, %v233
      %vm235 = vcmp.lt.s32.totalorder %v216, 1
      %vm236 = vcmp.lt.s32.totalorder %v216, 2
      %vm237 = vcmp.lt.s32.totalorder %v216, 3
      %vm238 = vcmp.lt.s32.totalorder %v216, 4
      %v239 = vsel %vm235, %v219, %v222
      %v240 = vsel %vm238, %v228, 2102212464
      %v241 = vsel %vm237, %v225, %v240
      %v242 = vsel %vm236, %v239, %v241
      %v243 = vsel %vm235, %v222, %v225
      %v244 = vsel %vm238, %v231, 920167782
      %v245 = vsel %vm237, %v228, %v244
      %v246 = vsel %vm236, %v243, %v245
      %v247 = vsel %vm235, %v225, %v228
      %v248 = vsel %vm238, %v234, 1326507024
      %v249 = vsel %vm237, %v231, %v248
      %v250 = vsel %vm236, %v247, %v249
      %v251 = vshll.u32 %v211, 8
      %v252 = vmul.u32.u64.compose %v251, %v250
      %v253 = vextract.low.u32 %v252
      %v254 = vextract.high.u32 %v252
      %v255 = vmul.u32.u64.compose %v251, %v246
      %v256 = vextract.low.u32 %v255
      %v257 = vextract.high.u32 %v255
      %v258 = vmul.u32 %v251, %v242
      %v259 = vadd.s32 %v254, %v256
      %vm260 = vc.u32 %v254, %v256
      %v261 = vadd.s32 %v257, 1
      %v262 = vsel %vm260, %v261, %v257
      %v263 = vadd.s32 %v258, %v262
      %v264 = vadd.s32 %v263, 536870912
      %v265 = vshrl.u32 %v264, 30
      %v266 = vshll.u32 %v265, 30
      %v267 = vsub.s32 %v263, %v266
      %vm268 = vcmp.lt.s32.totalorder %v267, 0
      %v269 = vsub.s32 0, %v267
      %v270 = vsel %vm268, %v269, %v267
      %v271 = vclz %v270
      %v272 = vsub.s32 %v271, 2
      %vm273 = vcmp.gt.s32.totalorder 0, %v272
      %v274 = vsel %vm273, 0, %v272
      %v275 = vsub.s32 32, %v274
      %v276 = vshll.u32 %v267, %v274
      %v277 = vshrl.u32 %v259, %v275
      %v278 = vor.u32 %v276, %v277
      %v279 = vsub.s32 4294967266, %v274
      %v280 = vadd.s32 %v279, 127
      %v281 = vshll.u32 %v280, 23
      %v282 = vor.u32 4788187, %v281
      %v283 = vand.u32 2147483647, %v282
      %v285 = vcvt.s32.f32 %v278
      %v286 = vmul.f32 %v285, %v283
      %v287 = vxor.u32 %v286, 2147483648
      %v288 = vsel %vm205, %v287, %v286
      %v289 = vsub.s32 4, %v265
      %v290 = vsel %vm205, %v289, %v265
      %v291 = vsel %vm204, %v99, %v288
      %v292 = vsel %vm204, 0, %v290
      %v293 = vcosq.f32.pop %v291
      %v294 = vsinq.f32.pop %v291
      %vm295 = vweird.f32 %v99
      %v296 = vadd.s32 %v292, 3
      %v297 = vand.u32 %v296, 3
      %vm298 = vcmp.lt.s32.totalorder %v297, 2
      %vm299 = vcmp.eq.s32.totalorder %v297, 0
      %v300 = vxor.u32 %v294, 2147483648
      %v301 = vsel %vm299, %v293, %v300
      %vm302 = vcmp.eq.s32.totalorder %v297, 2
      %v303 = vxor.u32 %v293, 2147483648
      %v304 = vsel %vm302, %v303, %v294
      %v305 = vsel %vm298, %v301, %v304
      %v306 = vsel %vm295, nan, %v305
      %v307 = vmul.f32 %v202, 0.5972224
      %v308 = vadd.f32 %v307, 0.4027776
      %v309 = vmul.f32 %v202, 0.37656432
      %v310 = vadd.f32 %v309, -0.37656432
      %v311 = vmul.f32 %v306, -0.49514174
      %v312 = vadd.f32 %v310, %v311
      %v313 = vmul.f32 %v202, -0.31424052
      %v314 = vadd.f32 %v313, 0.31424052
      %v315 = vmul.f32 %v306, -0.593344
      %v316 = vadd.f32 %v314, %v315
      %v317 = vmul.f32 %v306, 0.49514174
      %v318 = vadd.f32 %v310, %v317
      %v319 = vmul.f32 %v202, 0.64794296
      %v320 = vadd.f32 %v319, 0.35205704
      %v321 = vmul.f32 %v202, 0.29378936
      %v322 = vadd.f32 %v321, -0.29378936
      %v323 = vmul.f32 %v306, -0.6346476
      %v324 = vadd.f32 %v322, %v323
      %v325 = vmul.f32 %v306, 0.593344
      %v326 = vadd.f32 %v314, %v325
      %v327 = vmul.f32 %v306, 0.6346476
      %v328 = vadd.f32 %v322, %v327
      %v329 = vmul.f32 %v202, 0.75483465
      %v330 = vadd.f32 %v329, 0.24516533
      %v331 = vld [vmem:[#allocation2 + $0x8] sm:$0xff]
      %v332 = vld [vmem:[#allocation3 + $0x8] sm:$0xff]
      %v333 = vld [vmem:[#allocation4 + $0x8] sm:$0xff]
      %v334 = vsub.f32 %v331, -2.2964392
      %v335 = vsub.f32 %v332, 0.59433156
      %v336 = vsub.f32 %v333, -2.6210718
      %v337 = vlaneseq
      %v338 = vshrl.u32 %v337, 7
      %v339 = vsub.s32 3, %v338
      %v340 = vrot.slane %v308, %v339
      %v341 = vmul.f32 %v340, %v334
      %v342 = vlaneseq
      %v343 = vshrl.u32 %v342, 7
      %v344 = vsub.s32 3, %v343
      %v345 = vrot.slane %v312, %v344
      %v346 = vmul.f32 %v345, %v335
      %v347 = vadd.f32 %v341, %v346
      %v348 = vlaneseq
      %v349 = vshrl.u32 %v348, 7
      %v350 = vsub.s32 3, %v349
      %v351 = vrot.slane %v316, %v350
      %v352 = vmul.f32 %v351, %v336
      %v353 = vadd.f32 %v347, %v352
      %v354 = vadd.f32 %v353, -2.2964392
      %v355 = vlaneseq
      %v356 = vshrl.u32 %v355, 7
      %v357 = vsub.s32 3, %v356
      %v358 = vrot.slane %v318, %v357
      %v359 = vmul.f32 %v358, %v334
      %v360 = vlaneseq
      %v361 = vshrl.u32 %v360, 7
      %v362 = vsub.s32 3, %v361
      %v363 = vrot.slane %v320, %v362
      %v364 = vmul.f32 %v363, %v335
      %v365 = vadd.f32 %v359, %v364
      %v366 = vlaneseq
      %v367 = vshrl.u32 %v366, 7
      %v368 = vsub.s32 3, %v367
      %v369 = vrot.slane %v324, %v368
      %v370 = vmul.f32 %v369, %v336
      %v371 = vadd.f32 %v365, %v370
      %v372 = vadd.f32 %v371, 0.59433156
      %v373 = vlaneseq
      %v374 = vshrl.u32 %v373, 7
      %v375 = vsub.s32 3, %v374
      %v376 = vrot.slane %v326, %v375
      %v377 = vmul.f32 %v376, %v334
      %v378 = vlaneseq
      %v379 = vshrl.u32 %v378, 7
      %v380 = vsub.s32 3, %v379
      %v381 = vrot.slane %v328, %v380
      %v382 = vmul.f32 %v381, %v335
      %v383 = vadd.f32 %v377, %v382
      %v384 = vlaneseq
      %v385 = vshrl.u32 %v384, 7
      %v386 = vsub.s32 3, %v385
      %v387 = vrot.slane %v330, %v386
      %v388 = vmul.f32 %v387, %v336
      %v389 = vadd.f32 %v383, %v388
      %v390 = vadd.f32 %v389, -2.6210718
      %v391 = vadd.s32 %v82, 8
      %vm392 = vcmp.ge.s32.totalorder %v391, 8
      %vm393 = vcmp.lt.s32.totalorder %v391, 11
      %vm394 = vmand %vm392, %vm393
      %v395 = vsel %vm394, %v354, %v331
      %v396 = vsel %vm394, %v372, %v332
      %v397 = vsel %vm394, %v390, %v333
      %398 = vst [vmem:[#allocation2 + $0x8] sm:$0xff] %v395
      %399 = vst [vmem:[#allocation3 + $0x8] sm:$0xff] %v396
      %400 = vst [vmem:[#allocation4 + $0x8] sm:$0xff] %v397
      %v401 = vld [vmem:[#allocation2 + $0x8] sm:$0x1]
      %v402 = vld [vmem:[#allocation3 + $0x8] sm:$0x1]
      %v403 = vld [vmem:[#allocation4 + $0x8] sm:$0x1]
      %v404 = vld [vmem:[#allocation2 + $0x9] sm:$0x1]
      %v405 = vsub.f32 %v404, %v401
      %v406 = vld [vmem:[#allocation3 + $0x9] sm:$0x1]
      %v407 = vsub.f32 %v406, %v402
      %v408 = vld [vmem:[#allocation4 + $0x9] sm:$0x1]
      %v409 = vsub.f32 %v408, %v403
      %v410 = vmul.f32 %v405, %v405
      %v411 = vmul.f32 %v407, %v407
      %v412 = vadd.f32 %v410, %v411
      %v413 = vmul.f32 %v409, %v409
      %v414 = vadd.f32 %v412, %v413
      %v415 = vrsqrt.pop %v414
      %v416 = vmul.f32 %v414, 0.5
      %v417 = vmul.f32 %v416, %v415
      %v418 = vmul.f32 %v417, %v415
      %v419 = vsub.f32 1.5, %v418
      %v420 = vmul.f32 %v415, %v419
      %v421 = vmul.f32 %v405, %v420
      %v422 = vmul.f32 %v407, %v420
      %v423 = vmul.f32 %v409, %v420
      %v424 = vsub.f32 1.0, %v202
      %v426 = vrot.slane %v424, 4
      %v428 = vmul.f32 %v421, %v426
      %v429 = vmul.f32 %v422, %v426
      %v430 = vmul.f32 %v423, %v426
      %v432 = vrot.slane %v306, 4
      %v434 = vmul.f32 %v421, %v432
      %v435 = vmul.f32 %v422, %v432
      %v436 = vmul.f32 %v423, %v432
      %v437 = vmul.f32 %v421, %v428
      %v439 = vrot.slane %v437, 4
      %v441 = vadd.f32 %v202, %v439
      %v442 = vmul.f32 %v421, %v429
      %v443 = vsub.f32 %v442, %v436
      %v444 = vmul.f32 %v421, %v430
      %v445 = vadd.f32 %v444, %v435
      %v446 = vmul.f32 %v422, %v428
      %v447 = vadd.f32 %v446, %v436
      %v448 = vmul.f32 %v422, %v429
      %v450 = vrot.slane %v448, 4
      %v452 = vadd.f32 %v202, %v450
      %v453 = vmul.f32 %v422, %v430
      %v454 = vsub.f32 %v453, %v434
      %v455 = vmul.f32 %v423, %v428
      %v456 = vsub.f32 %v455, %v435
      %v457 = vmul.f32 %v423, %v429
      %v458 = vadd.f32 %v457, %v434
      %v459 = vmul.f32 %v423, %v430
      %v461 = vrot.slane %v459, 4
      %v463 = vadd.f32 %v202, %v461
      %v464 = vld [vmem:[#allocation2 + $0x8] sm:$0xff]
      %v465 = vld [vmem:[#allocation3 + $0x8] sm:$0xff]
      %v466 = vld [vmem:[#allocation4 + $0x8] sm:$0xff]
      %v467 = vlaneseq
      %v468 = vshrl.u32 %v467, 7
      %v469 = vsub.s32 0, %v468
      %v470 = vrot.slane %v401, %v469
      %v471 = vsub.f32 %v464, %v470
      %v472 = vlaneseq
      %v473 = vshrl.u32 %v472, 7
      %v474 = vsub.s32 0, %v473
      %v475 = vrot.slane %v402, %v474
      %v476 = vsub.f32 %v465, %v475
      %v477 = vlaneseq
      %v478 = vshrl.u32 %v477, 7
      %v479 = vsub.s32 0, %v478
      %v480 = vrot.slane %v403, %v479
      %v481 = vsub.f32 %v466, %v480
      %v482 = vlaneseq
      %v483 = vshrl.u32 %v482, 7
      %v484 = vsub.s32 4, %v483
      %v485 = vrot.slane %v441, %v484
      %v486 = vmul.f32 %v485, %v471
      %v487 = vlaneseq
      %v488 = vshrl.u32 %v487, 7
      %v489 = vsub.s32 0, %v488
      %v490 = vrot.slane %v443, %v489
      %v491 = vmul.f32 %v490, %v476
      %v492 = vadd.f32 %v486, %v491
      %v493 = vlaneseq
      %v494 = vshrl.u32 %v493, 7
      %v495 = vsub.s32 0, %v494
      %v496 = vrot.slane %v445, %v495
      %v497 = vmul.f32 %v496, %v481
      %v498 = vadd.f32 %v492, %v497
      %v499 = vadd.f32 %v498, %v470
      %v500 = vlaneseq
      %v501 = vshrl.u32 %v500, 7
      %v502 = vsub.s32 0, %v501
      %v503 = vrot.slane %v447, %v502
      %v504 = vmul.f32 %v503, %v471
      %v505 = vlaneseq
      %v506 = vshrl.u32 %v505, 7
      %v507 = vsub.s32 4, %v506
      %v508 = vrot.slane %v452, %v507
      %v509 = vmul.f32 %v508, %v476
      %v510 = vadd.f32 %v504, %v509
      %v511 = vlaneseq
      %v512 = vshrl.u32 %v511, 7
      %v513 = vsub.s32 0, %v512
      %v514 = vrot.slane %v454, %v513
      %v515 = vmul.f32 %v514, %v481
      %v516 = vadd.f32 %v510, %v515
      %v517 = vadd.f32 %v516, %v475
      %v518 = vlaneseq
      %v519 = vshrl.u32 %v518, 7
      %v520 = vsub.s32 0, %v519
      %v521 = vrot.slane %v456, %v520
      %v522 = vmul.f32 %v521, %v471
      %v523 = vlaneseq
      %v524 = vshrl.u32 %v523, 7
      %v525 = vsub.s32 0, %v524
      %v526 = vrot.slane %v458, %v525
      %v527 = vmul.f32 %v526, %v476
      %v528 = vadd.f32 %v522, %v527
      %v529 = vlaneseq
      %v530 = vshrl.u32 %v529, 7
      %v531 = vsub.s32 4, %v530
      %v532 = vrot.slane %v463, %v531
      %v533 = vmul.f32 %v532, %v481
      %v534 = vadd.f32 %v528, %v533
      %v535 = vadd.f32 %v534, %v480
      %vm536 = vcmp.ge.s32.totalorder %v391, 9
      %vm537 = vmand %vm536, %vm393
      %v538 = vsel %vm537, %v499, %v464
      %v539 = vsel %vm537, %v517, %v465
      %v540 = vsel %vm537, %v535, %v466
      %541 = vst [vmem:[#allocation2 + $0x8] sm:$0xff] %v538
      %542 = vst [vmem:[#allocation3 + $0x8] sm:$0xff] %v539
      %543 = vst [vmem:[#allocation4 + $0x8] sm:$0xff] %v540
      %v544 = vmul.f32 %v202, 0.40015614
      %v545 = vadd.f32 %v544, 0.59984386
      %v546 = vmul.f32 %v202, 0.21778412
      %v547 = vadd.f32 %v546, -0.21778412
      %v548 = vmul.f32 %v306, 0.56664425
      %v549 = vadd.f32 %v547, %v548
      %v550 = vmul.f32 %v202, 0.43886364
      %v551 = vadd.f32 %v550, -0.43886364
      %v552 = vmul.f32 %v306, -0.2811947
      %v553 = vadd.f32 %v551, %v552
      %v554 = vmul.f32 %v306, -0.56664425
      %v555 = vadd.f32 %v547, %v554
      %v556 = vmul.f32 %v202, 0.92092955
      %v557 = vadd.f32 %v556, 0.07907045
      %v558 = vmul.f32 %v202, -0.15933734
      %v559 = vadd.f32 %v558, 0.15933734
      %v560 = vmul.f32 %v306, -0.7744959
      %v561 = vadd.f32 %v559, %v560
      %v562 = vmul.f32 %v306, 0.2811947
      %v563 = vadd.f32 %v551, %v562
      %v564 = vmul.f32 %v306, 0.7744959
      %v565 = vadd.f32 %v559, %v564
      %v566 = vmul.f32 %v202, 0.6789143
      %v567 = vadd.f32 %v566, 0.3210857
      %v568 = vld [vmem:[#allocation2 + $0x8] sm:$0xff]
      %v569 = vld [vmem:[#allocation3 + $0x8] sm:$0xff]
      %v570 = vld [vmem:[#allocation4 + $0x8] sm:$0xff]
      %v571 = vsub.f32 %v568, -2.3176477
      %v572 = vsub.f32 %v569, -1.0864826
      %v573 = vsub.f32 %v570, 1.6156608
      %v574 = vlaneseq
      %v575 = vshrl.u32 %v574, 7
      %v576 = vsub.s32 5, %v575
      %v577 = vrot.slane %v545, %v576
      %v578 = vmul.f32 %v577, %v571
      %v579 = vlaneseq
      %v580 = vshrl.u32 %v579, 7
      %v581 = vsub.s32 5, %v580
      %v582 = vrot.slane %v549, %v581
      %v583 = vmul.f32 %v582, %v572
      %v584 = vadd.f32 %v578, %v583
      %v585 = vlaneseq
      %v586 = vshrl.u32 %v585, 7
      %v587 = vsub.s32 5, %v586
      %v588 = vrot.slane %v553, %v587
      %v589 = vmul.f32 %v588, %v573
      %v590 = vadd.f32 %v584, %v589
      %v591 = vadd.f32 %v590, -2.3176477
      %v592 = vlaneseq
      %v593 = vshrl.u32 %v592, 7
      %v594 = vsub.s32 5, %v593
      %v595 = vrot.slane %v555, %v594
      %v596 = vmul.f32 %v595, %v571
      %v597 = vlaneseq
      %v598 = vshrl.u32 %v597, 7
      %v599 = vsub.s32 5, %v598
      %v600 = vrot.slane %v557, %v599
      %v601 = vmul.f32 %v600, %v572
      %v602 = vadd.f32 %v596, %v601
      %v603 = vlaneseq
      %v604 = vshrl.u32 %v603, 7
      %v605 = vsub.s32 5, %v604
      %v606 = vrot.slane %v561, %v605
      %v607 = vmul.f32 %v606, %v573
      %v608 = vadd.f32 %v602, %v607
      %v609 = vadd.f32 %v608, -1.0864826
      %v610 = vlaneseq
      %v611 = vshrl.u32 %v610, 7
      %v612 = vsub.s32 5, %v611
      %v613 = vrot.slane %v563, %v612
      %v614 = vmul.f32 %v613, %v571
      %v615 = vlaneseq
      %v616 = vshrl.u32 %v615, 7
      %v617 = vsub.s32 5, %v616
      %v618 = vrot.slane %v565, %v617
      %v619 = vmul.f32 %v618, %v572
      %v620 = vadd.f32 %v614, %v619
      %v621 = vlaneseq
      %v622 = vshrl.u32 %v621, 7
      %v623 = vsub.s32 5, %v622
      %v624 = vrot.slane %v567, %v623
      %v625 = vmul.f32 %v624, %v573
      %v626 = vadd.f32 %v620, %v625
      %v627 = vadd.f32 %v626, 1.6156608
      %vm628 = vcmp.ge.s32.totalorder %v391, 11
      %vm629 = vcmp.lt.s32.totalorder %v391, 16
      %vm630 = vmand %vm628, %vm629
      %v631 = vsel %vm630, %v591, %v568
      %v632 = vsel %vm630, %v609, %v569
      %v633 = vsel %vm630, %v627, %v570
      %634 = vst [vmem:[#allocation2 + $0x8] sm:$0xff] %v631
      %635 = vst [vmem:[#allocation3 + $0x8] sm:$0xff] %v632
      %636 = vst [vmem:[#allocation4 + $0x8] sm:$0xff] %v633
      %v638 = vrot.slane %v202, 1
      %v640 = vmul.f32 %v202, %v638
      %v641 = vrot.slane %v306, 1
      %v643 = vmul.f32 %v306, %v641
      %v644 = vmul.f32 %v306, %v638
      %v645 = vmul.f32 %v202, %v641
      %v647 = vrot.slane %v640, 1
      %v649 = vmul.f32 %v202, %v647
      %v651 = vrot.slane %v643, 1
      %v653 = vmul.f32 %v306, %v651
      %v654 = vadd.f32 %v649, %v653
      %v655 = vmul.f32 %v306, %v647
      %v656 = vmul.f32 %v202, %v651
      %v657 = vsub.f32 %v655, %v656
      %v659 = vrot.slane %v644, 1
      %v661 = vmul.f32 %v202, %v659
      %v663 = vrot.slane %v645, 1
      %v665 = vmul.f32 %v306, %v663
      %v666 = vadd.f32 %v661, %v665
      %v667 = vmul.f32 %v202, %v663
      %v668 = vmul.f32 %v306, %v659
      %v669 = vsub.f32 %v667, %v668
      %v670 = vmul.f32 %v657, %v657
      %v671 = vmul.f32 %v666, %v666
      %v672 = vmul.f32 %v669, %v669
      %v673 = vmul.f32 %v657, %v666
      %v674 = vmul.f32 %v657, %v669
      %v675 = vmul.f32 %v666, %v669
      %v676 = vmul.f32 %v654, %v657
      %v677 = vmul.f32 %v654, %v666
      %v678 = vmul.f32 %v654, %v669
      %v679 = vadd.f32 %v671, %v672
      %v680 = vmul.f32 %v679, 2.0
      %v681 = vsub.f32 1.0, %v680
      %v682 = vsub.f32 %v673, %v678
      %v683 = vmul.f32 %v682, 2.0
      %v684 = vadd.f32 %v674, %v677
      %v685 = vmul.f32 %v684, 2.0
      %v686 = vadd.f32 %v673, %v678
      %v687 = vmul.f32 %v686, 2.0
      %v688 = vadd.f32 %v670, %v672
      %v689 = vmul.f32 %v688, 2.0
      %v690 = vsub.f32 1.0, %v689
      %v691 = vsub.f32 %v675, %v676
      %v692 = vmul.f32 %v691, 2.0
      %v693 = vsub.f32 %v674, %v677
      %v694 = vmul.f32 %v693, 2.0
      %v695 = vadd.f32 %v675, %v676
      %v696 = vmul.f32 %v695, 2.0
      %v697 = vadd.f32 %v670, %v671
      %v698 = vmul.f32 %v697, 2.0
      %v699 = vsub.f32 1.0, %v698
      %v700 = vld [vmem:[%s78] ss:$0 sm:$0xff]
      %v701 = vld [vmem:[%s78 + $0x1] ss:$0 sm:$0xff]
      %v702 = vld [vmem:[%s78 + $0x2] ss:$0 sm:$0xff]
      %v703 = vld [vmem:[#allocation2] sm:$0xff]
      %v704 = vld [vmem:[#allocation3] sm:$0xff]
      %v705 = vld [vmem:[#allocation4] sm:$0xff]
      %v706 = vlaneseq
      %v707 = vshrl.u32 %v706, 7
      %v708 = vsub.s32 0, %v707
      %v709 = vrot.slane %v681, %v708
      %v710 = vmul.f32 %v709, %v703
      %v711 = vlaneseq
      %v712 = vshrl.u32 %v711, 7
      %v713 = vsub.s32 0, %v712
      %v714 = vrot.slane %v687, %v713
      %v715 = vmul.f32 %v714, %v704
      %v716 = vadd.f32 %v710, %v715
      %v717 = vlaneseq
      %v718 = vshrl.u32 %v717, 7
      %v719 = vsub.s32 0, %v718
      %v720 = vrot.slane %v694, %v719
      %v721 = vmul.f32 %v720, %v705
      %v722 = vadd.f32 %v716, %v721
      %v723 = vadd.f32 %v722, %v700
      %s724 = smul.addr %s75, 8
      %s725 = scalar_lea.vmem [#allocation8], %s724
      %726 = vst [vmem:[%s725] sm:$0xff] %v723
      %v727 = vlaneseq
      %v728 = vshrl.u32 %v727, 7
      %v729 = vsub.s32 0, %v728
      %v730 = vrot.slane %v683, %v729
      %v731 = vmul.f32 %v730, %v703
      %v732 = vlaneseq
      %v733 = vshrl.u32 %v732, 7
      %v734 = vsub.s32 0, %v733
      %v735 = vrot.slane %v690, %v734
      %v736 = vmul.f32 %v735, %v704
      %v737 = vadd.f32 %v731, %v736
      %v738 = vlaneseq
      %v739 = vshrl.u32 %v738, 7
      %v740 = vsub.s32 0, %v739
      %v741 = vrot.slane %v696, %v740
      %v742 = vmul.f32 %v741, %v705
      %v743 = vadd.f32 %v737, %v742
      %v744 = vadd.f32 %v743, %v701
      %s745 = sadd.s32 %s75, 4
      %s746 = smul.addr %s745, 8
      %s747 = scalar_lea.vmem [#allocation8], %s746
      %748 = vst [vmem:[%s747] sm:$0xff] %v744
      %v749 = vlaneseq
      %v750 = vshrl.u32 %v749, 7
      %v751 = vsub.s32 0, %v750
      %v752 = vrot.slane %v685, %v751
      %v753 = vmul.f32 %v752, %v703
      %v754 = vlaneseq
      %v755 = vshrl.u32 %v754, 7
      %v756 = vsub.s32 0, %v755
      %v757 = vrot.slane %v692, %v756
      %v758 = vmul.f32 %v757, %v704
      %v759 = vadd.f32 %v753, %v758
      %v760 = vlaneseq
      %v761 = vshrl.u32 %v760, 7
      %v762 = vsub.s32 0, %v761
      %v763 = vrot.slane %v699, %v762
      %v764 = vmul.f32 %v763, %v705
      %v765 = vadd.f32 %v759, %v764
      %v766 = vadd.f32 %v765, %v702
      %s767 = sadd.s32 %s75, 8
      %s768 = smul.addr %s767, 8
      %s769 = scalar_lea.vmem [#allocation8], %s768
      %770 = vst [vmem:[%s769] sm:$0xff] %v766
      %v771 = vld [vmem:[#allocation2 + $0x8] sm:$0xff]
      %v772 = vld [vmem:[#allocation3 + $0x8] sm:$0xff]
      %v773 = vld [vmem:[#allocation4 + $0x8] sm:$0xff]
      %v774 = vmul.f32 %v709, %v771
      %v775 = vmul.f32 %v714, %v772
      %v776 = vadd.f32 %v774, %v775
      %v777 = vmul.f32 %v720, %v773
      %v778 = vadd.f32 %v776, %v777
      %v779 = vadd.f32 %v778, %v700
      %780 = vst [vmem:[%s725 + $0x10] sm:$0xff] %v779
      %v781 = vmul.f32 %v730, %v771
      %v782 = vmul.f32 %v735, %v772
      %v783 = vadd.f32 %v781, %v782
      %v784 = vmul.f32 %v741, %v773
      %v785 = vadd.f32 %v783, %v784
      %v786 = vadd.f32 %v785, %v701
      %787 = vst [vmem:[%s747 + $0x10] sm:$0xff] %v786
      %v788 = vmul.f32 %v752, %v771
      %v789 = vmul.f32 %v757, %v772
      %v790 = vadd.f32 %v788, %v789
      %v791 = vmul.f32 %v763, %v773
      %v792 = vadd.f32 %v790, %v791
      %v793 = vadd.f32 %v792, %v702
      %794 = vst [vmem:[%s769 + $0x10] sm:$0xff] %v793
    $region18: #{tpu_custom_call.1} parent=1 // loop_footer
      %s52 = sadd.s32 1, %s48
    $region19: #{tpu_custom_call.1} parent=1 // loop_footer_branch
      %47 = sbr.rel target = $region15
    $region20: #{tpu_custom_call.1} parent=1 // loop_exit
      _
    // Predicated region
    $region21: #{tpu_custom_call.1} parent=1 // pred_check
      _
    $region22: #{tpu_custom_call.1} parent=1 // pred_check_branch
      %796 = sbr.rel (0) target = $region24
    $region23: #{tpu_custom_call.1} parent=1 // pred_region
      %s798 = ssub.s32 1536, 1536
      %799 = vsyncadd [#allocation7], %s798
      %s800 = sshll.u32 [#allocation8], 4
      %s801 = int_to_ptr.vmem [resolvable:$true] %s800
      %806 = dma.vmem_to_hbm [thread:$0]  %s801, 1536, %s2, [#allocation7], 256, 256, 16
    $region24: #{tpu_custom_call.1} parent=1 // pred_fallthru
      _
    // Predicated region
    $region25: #{tpu_custom_call.1} parent=1 // pred_check
      _
    $region26: #{tpu_custom_call.1} parent=1 // pred_check_branch
      %808 = sbr.rel (0) target = $region28
    $region27: #{tpu_custom_call.1} parent=1 // pred_region
      %809 = dma.done [#allocation7], 1536
    $region28: #{tpu_custom_call.1} parent=1 // pred_fallthru
      _
    %810 = vsyncpa [#allocation6], 1
    %811 = vsyncpa [#allocation7], 1

</llo_original>
